<compile_context>
chip_gen: v7x
topology: tpu7x:2x2x1
jax: 0.10.0
libtpu: 0.0.40
codegen_flags: <defaults>
</compile_context>

<pallas_src>
import functools
import math

import jax
import jax.numpy as jnp
from jax.experimental import pallas as pl
from jax.experimental.pallas import tpu as pltpu


def _pconv_lr3d_kernel(x_ref, m_ref, w_ref, ones_ref, b_ref, o_ref, um_ref, *,
                       TD, H, W, Cin, Cout, Wp, slide_winsize, neg_slope):
    # x_ref    : (D+2, H+2, Wp*Cin)     bf16 zero-padded image, one sample (W,Cin folded into lanes)
    # m_ref    : (D+2, H+2, Wp*Cin)     bf16 zero-padded mask
    # w_ref    : (3, 3, Wp*Cin, W*Cout) bf16 banded conv weight, one band per (kd, kh)
    # ones_ref : (Wp*Cin, W*Cout)       bf16 banded all-ones weight (mask window-sum)
    # b_ref    : (1, W*Cout)            f32  bias tiled so column w*Cout+co holds bias[co]
    # o_ref    : (TD*H, W*Cout)         f32  lane-dense output chunk
    # um_ref   : (TD*H, W*Cout)         f32  lane-dense updated-mask chunk
    d0 = pl.multiple_of(pl.program_id(1) * TD, TD)   # first output depth of this chunk
    x_c = x_ref[pl.ds(d0, TD + 2)]                   # (TD+2, H+2, Wp*Cin), includes depth halo
    m_c = m_ref[pl.ds(d0, TD + 2)]
    xm = x_c * m_c                                   # masked image (mask is exact 0/1 in bf16)

    acc = jnp.zeros((TD * H, W * Cout), jnp.float32)    # conv(x*mask, W), f32 accumulation
    msum = jnp.zeros((TD * H, W * Cout), jnp.float32)   # conv(mask, ones), Cout-replicated
    ones_band = ones_ref[...]
    for kd in range(3):
        for kh in range(3):
            lhs_x = xm[kd:kd + TD, kh:kh + H, :].reshape(TD * H, Wp * Cin)
            lhs_m = m_c[kd:kd + TD, kh:kh + H, :].reshape(TD * H, Wp * Cin)
            acc = acc + jnp.dot(lhs_x, w_ref[kd, kh],
                                preferred_element_type=jnp.float32)
            msum = msum + jnp.dot(lhs_m, ones_band,
                                  preferred_element_type=jnp.float32)

    # partial-conv renormalization + bias + mask gating + LeakyReLU (all f32, lane-dense layout)
    um = jnp.clip(msum, 0.0, 1.0)
    ratio = (slide_winsize * pl.reciprocal(msum + 1e-8, approx=True)) * um
    out = (acc * ratio + b_ref[...]) * um
    out = jnp.where(out >= 0, out, neg_slope * out)

    o_ref[...] = out.astype(o_ref.dtype)
    um_ref[...] = um.astype(um_ref.dtype)


def _pick_depth_tile(D, H, target=4):
    """Largest depth chunk <= target dividing D with (chunk*H) % 8 == 0; else full depth."""
    for td in range(min(target, D), 0, -1):
        if D % td == 0 and (td * H) % 8 == 0:
            return td
    return D


def pconv_lr3d(image, mask, weight, bias, *, negative_slope=0.01, stride=1):
    """Forward of PConvLR3d.

    image, mask : (N, Cin, D, H, W)  float32, PyTorch NCDHW layout (multi-channel mask)
    weight      : (Cout, Cin, 3, 3, 3)
    bias        : (Cout,)
    returns (output, new_mask), both (N, Cout, D, H, W).
    """
    # TODO(synk): only stride=1 (the module default) is implemented.
    assert stride == 1, "only stride=1 is supported"
    N, Cin, D, H, W = image.shape
    Cout = weight.shape[0]
    Dp, Hp, Wp = D + 2, H + 2, W + 2

    # --- host-side layout prep: NCDHW -> channels-last, pad=1, fold (W,Cin) into lanes, bf16 ---
    pad = ((0, 0), (1, 1), (1, 1), (1, 1), (0, 0))
    x_pad = jnp.pad(jnp.transpose(image, (0, 2, 3, 4, 1)), pad)
    m_pad = jnp.pad(jnp.transpose(mask, (0, 2, 3, 4, 1)), pad)
    x_pad = x_pad.reshape(N, Dp, Hp, Wp * Cin).astype(jnp.bfloat16)
    m_pad = m_pad.reshape(N, Dp, Hp, Wp * Cin).astype(jnp.bfloat16)

    # --- banded RHS: band[kd, kh, w_in*Cin+ci, w_out*Cout+co] = weight[co, ci, kd, kh, w_in-w_out]
    #     (zero outside the 3-wide band).  Makes the matmul emit the (D*H, W*Cout) layout directly.
    w_in = jnp.arange(Wp)[:, None]
    w_out = jnp.arange(W)[None, :]
    sel = jnp.stack([(w_in == w_out + kw) for kw in range(3)]).astype(jnp.float32)  # (3, Wp, W)
    wk = jnp.transpose(weight, (2, 3, 4, 1, 0))                                     # (kd,kh,kw,Cin,Cout)
    w_band = jnp.einsum("kxw,dhkic->dhxiwc", sel, wk)
    w_band = w_band.reshape(3, 3, Wp * Cin, W * Cout).astype(jnp.bfloat16)
    ones_band = jnp.einsum("kxw,ic->xiwc", sel, jnp.ones((Cin, Cout), jnp.float32))
    ones_band = ones_band.reshape(Wp * Cin, W * Cout).astype(jnp.bfloat16)

    # bias tiled into the lane-dense output layout (column w*Cout + co holds bias[co])
    b_tiled = jnp.tile(bias, W).reshape(1, W * Cout).astype(jnp.float32)

    TD = _pick_depth_tile(D, H)
    DC = D // TD

    kernel = functools.partial(
        _pconv_lr3d_kernel, TD=TD, H=H, W=W, Cin=Cin, Cout=Cout, Wp=Wp,
        slide_winsize=float(Cin * 27), neg_slope=float(negative_slope))

    out_flat, um_flat = pl.pallas_call(
        kernel,
        out_shape=(
            jax.ShapeDtypeStruct((N, D * H, W * Cout), jnp.float32),
            jax.ShapeDtypeStruct((N, D * H, W * Cout), jnp.float32),
        ),
        grid_spec=pltpu.PrefetchScalarGridSpec(
            num_scalar_prefetch=0,
            grid=(N, DC),
            in_specs=[
                # full padded sample, resident across the depth-chunk axis
                pl.BlockSpec((None, Dp, Hp, Wp * Cin), lambda n, c: (n, 0, 0, 0)),
                pl.BlockSpec((None, Dp, Hp, Wp * Cin), lambda n, c: (n, 0, 0, 0)),
                pl.BlockSpec((3, 3, Wp * Cin, W * Cout), lambda n, c: (0, 0, 0, 0)),
                pl.BlockSpec((Wp * Cin, W * Cout), lambda n, c: (0, 0)),
                pl.BlockSpec((1, W * Cout), lambda n, c: (0, 0)),
            ],
            out_specs=(
                pl.BlockSpec((None, TD * H, W * Cout), lambda n, c: (n, c, 0)),
                pl.BlockSpec((None, TD * H, W * Cout), lambda n, c: (n, c, 0)),
            ),
        ),
        compiler_params=pltpu.CompilerParams(
            dimension_semantics=("parallel", "parallel"),
            vmem_limit_bytes=32 * 1024 * 1024),
    )(x_pad, m_pad, w_band, ones_band, b_tiled)

    # lane-dense (N, D*H, W*Cout) -> NCDHW for PyTorch parity (skip if consumer is channels-last)
    out = out_flat.reshape(N, D, H, W, Cout).transpose(0, 4, 1, 2, 3)
    new_mask = um_flat.reshape(N, D, H, W, Cout).transpose(0, 4, 1, 2, 3)
    return out, new_mask


def _reference(image, mask, weight, bias, negative_slope=0.01):
    """Pure-JAX f32 reference of PartialConv3d(multi_channel=True, bias) + LeakyReLU."""
    Cout = weight.shape[0]
    Cin = weight.shape[1]
    dn = ("NCDHW", "OIDHW", "NCDHW")
    conv = jax.lax.conv_general_dilated(
        image * mask, weight, (1, 1, 1), [(1, 1)] * 3, dimension_numbers=dn)
    msum = jax.lax.conv_general_dilated(
        mask, jnp.ones_like(weight), (1, 1, 1), [(1, 1)] * 3, dimension_numbers=dn)
    slide = float(Cin * 27)
    ratio = slide / (msum + 1e-8)
    um = jnp.clip(msum, 0.0, 1.0)
    ratio = ratio * um
    b = bias.reshape(1, Cout, 1, 1, 1)
    out = (conv * ratio + b) * um
    out = jnp.where(out >= 0, out, negative_slope * out)
    return out, um


if __name__ == "__main__":
    key = jax.random.PRNGKey(0)
    k_x, k_m, k_w, k_b = jax.random.split(key, 4)

    # Small shapes consistent with the module: batch=2, in_c=8, out_c=16, spatial 8^3.
    # (W*Cout = 128 -> full-lane stores; (W+2)*Cin = 80 -> lane-dense inputs.)
    N, Cin, Cout, D, H, W = 2, 8, 16, 8, 8, 8

    x_ncdhw = jax.random.normal(k_x, (N, Cin, D, H, W), jnp.float32)
    mask_ncdhw = (jax.random.uniform(k_m, (N, Cin, D, H, W)) > 0.3).astype(jnp.float32)

    fan_in = Cin * 3 * 3 * 3
    bound = 1.0 / math.sqrt(fan_in)
    w_oidhw = jax.random.uniform(k_w, (Cout, Cin, 3, 3, 3), jnp.float32, -bound, bound)
    bias = jax.random.uniform(k_b, (Cout,), jnp.float32, -bound, bound)

    out, new_mask = pconv_lr3d(x_ncdhw, mask_ncdhw, w_oidhw, bias)
    out = jax.block_until_ready(out)
    new_mask = jax.block_until_ready(new_mask)

    assert out.shape == (N, Cout, D, H, W)
    assert new_mask.shape == (N, Cout, D, H, W)

    ref_out, ref_mask = _reference(x_ncdhw, mask_ncdhw, w_oidhw, bias)
    # bf16 matmul operands + EUP approx reciprocal vs an all-f32 reference -> ~1e-3 noise; 1e-2 is safe.
    assert jnp.allclose(out, ref_out, rtol=1e-2, atol=1e-2), "output mismatch vs reference partial conv"
    # mask path is exact (0/1 values, integer window sums, f32 accumulation)
    assert jnp.allclose(new_mask, ref_mask, rtol=1e-5, atol=1e-5), "updated mask mismatch vs reference"

    print("KERNEL_OK")
</pallas_src>

<mosaic_0001>
module attributes {stable_mosaic.version = 11 : i64} {
  func.func @_pconv_lr3d_kernel(%arg0: i32, %arg1: i32, %arg2: memref<1x10x10x80xbf16, #tpu.memory_space<vmem>>, %arg3: memref<1x10x10x80xbf16, #tpu.memory_space<vmem>>, %arg4: memref<3x3x80x128xbf16, #tpu.memory_space<vmem>>, %arg5: memref<80x128xbf16, #tpu.memory_space<vmem>>, %arg6: memref<1x128xf32, #tpu.memory_space<vmem>>, %arg7: memref<1x32x128xf32, #tpu.memory_space<vmem>>, %arg8: memref<1x32x128xf32, #tpu.memory_space<vmem>>) attributes {dimension_semantics = [#tpu.dimension_semantics<parallel>, #tpu.dimension_semantics<parallel>], iteration_bounds = array<i64: 2, 2>, scalar_prefetch = 0 : i64, scratch_operands = 0 : i64, tpu.core_type = #tpu.core_type<tc>, window_params = [{transform_indices = @transform_0, window_bounds = array<i64: 1, 10, 10, 80>}, {transform_indices = @transform_1, window_bounds = array<i64: 1, 10, 10, 80>}, {pipeline_mode = #tpu.pipeline_mode<synchronous>, transform_indices = @transform_2, window_bounds = array<i64: 3, 3, 80, 128>}, {pipeline_mode = #tpu.pipeline_mode<synchronous>, transform_indices = @transform_3, window_bounds = array<i64: 80, 128>}, {pipeline_mode = #tpu.pipeline_mode<synchronous>, transform_indices = @transform_4, window_bounds = array<i64: 1, 128>}, {transform_indices = @transform_5, window_bounds = array<i64: 1, 32, 128>}, {transform_indices = @transform_6, window_bounds = array<i64: 1, 32, 128>}]} {
    %c4_i32 = arith.constant 4 : i32
    %0 = arith.muli %arg1, %c4_i32 : i32
    %1 = tpu.assume_multiple %0, 4 : i32
    %c0 = arith.constant 0 : index
    %2 = arith.index_cast %1 : i32 to index
    %c0_0 = arith.constant 0 : index
    %c0_1 = arith.constant 0 : index
    %3 = vector.load %arg2[%c0, %2, %c0_0, %c0_1] : memref<1x10x10x80xbf16, #tpu.memory_space<vmem>>, vector<1x6x10x80xbf16>
    %4 = vector.shape_cast %3 : vector<1x6x10x80xbf16> to vector<6x10x80xbf16>
    %c0_2 = arith.constant 0 : index
    %5 = arith.index_cast %1 : i32 to index
    %c0_3 = arith.constant 0 : index
    %c0_4 = arith.constant 0 : index
    %6 = vector.load %arg3[%c0_2, %5, %c0_3, %c0_4] : memref<1x10x10x80xbf16, #tpu.memory_space<vmem>>, vector<1x6x10x80xbf16>
    %7 = vector.shape_cast %6 : vector<1x6x10x80xbf16> to vector<6x10x80xbf16>
    %8 = arith.mulf %4, %7 : vector<6x10x80xbf16>
    %cst = arith.constant 0.000000e+00 : f32
    %9 = vector.broadcast %cst : f32 to vector<32x128xf32>
    %cst_5 = arith.constant 0.000000e+00 : f32
    %10 = vector.broadcast %cst_5 : f32 to vector<32x128xf32>
    %c0_6 = arith.constant 0 : index
    %c0_7 = arith.constant 0 : index
    %11 = vector.load %arg5[%c0_6, %c0_7] : memref<80x128xbf16, #tpu.memory_space<vmem>>, vector<80x128xbf16>
    %12 = vector.extract_strided_slice %8 {offsets = [0, 0, 0], sizes = [4, 8, 80], strides = [1, 1, 1]} : vector<6x10x80xbf16> to vector<4x8x80xbf16>
    %13 = vector.shape_cast %12 : vector<4x8x80xbf16> to vector<32x80xbf16>
    %14 = vector.extract_strided_slice %7 {offsets = [0, 0, 0], sizes = [4, 8, 80], strides = [1, 1, 1]} : vector<6x10x80xbf16> to vector<4x8x80xbf16>
    %15 = vector.shape_cast %14 : vector<4x8x80xbf16> to vector<32x80xbf16>
    %c0_8 = arith.constant 0 : index
    %c0_9 = arith.constant 0 : index
    %c0_10 = arith.constant 0 : index
    %c0_11 = arith.constant 0 : index
    %16 = vector.load %arg4[%c0_8, %c0_9, %c0_10, %c0_11] : memref<3x3x80x128xbf16, #tpu.memory_space<vmem>>, vector<1x1x80x128xbf16>
    %17 = vector.shape_cast %16 : vector<1x1x80x128xbf16> to vector<80x128xbf16>
    %cst_12 = arith.constant dense<0.000000e+00> : vector<32x128xf32>
    %18 = tpu.matmul %13, %17, %cst_12 {dimension_numbers = #tpu.dot_dimension_numbers<[1], [0], [0], [1], [0, 0, 1, 1], [], []>} : vector<32x80xbf16>, vector<80x128xbf16>, vector<32x128xf32> -> vector<32x128xf32>
    %19 = arith.addf %9, %18 : vector<32x128xf32>
    %cst_13 = arith.constant dense<0.000000e+00> : vector<32x128xf32>
    %20 = tpu.matmul %15, %11, %cst_13 {dimension_numbers = #tpu.dot_dimension_numbers<[1], [0], [0], [1], [0, 0, 1, 1], [], []>} : vector<32x80xbf16>, vector<80x128xbf16>, vector<32x128xf32> -> vector<32x128xf32>
    %21 = arith.addf %10, %20 : vector<32x128xf32>
    %22 = vector.extract_strided_slice %8 {offsets = [0, 1, 0], sizes = [4, 8, 80], strides = [1, 1, 1]} : vector<6x10x80xbf16> to vector<4x8x80xbf16>
    %23 = vector.shape_cast %22 : vector<4x8x80xbf16> to vector<32x80xbf16>
    %24 = vector.extract_strided_slice %7 {offsets = [0, 1, 0], sizes = [4, 8, 80], strides = [1, 1, 1]} : vector<6x10x80xbf16> to vector<4x8x80xbf16>
    %25 = vector.shape_cast %24 : vector<4x8x80xbf16> to vector<32x80xbf16>
    %c0_14 = arith.constant 0 : index
    %c1 = arith.constant 1 : index
    %c0_15 = arith.constant 0 : index
    %c0_16 = arith.constant 0 : index
    %26 = vector.load %arg4[%c0_14, %c1, %c0_15, %c0_16] : memref<3x3x80x128xbf16, #tpu.memory_space<vmem>>, vector<1x1x80x128xbf16>
    %27 = vector.shape_cast %26 : vector<1x1x80x128xbf16> to vector<80x128xbf16>
    %cst_17 = arith.constant dense<0.000000e+00> : vector<32x128xf32>
    %28 = tpu.matmul %23, %27, %cst_17 {dimension_numbers = #tpu.dot_dimension_numbers<[1], [0], [0], [1], [0, 0, 1, 1], [], []>} : vector<32x80xbf16>, vector<80x128xbf16>, vector<32x128xf32> -> vector<32x128xf32>
    %29 = arith.addf %19, %28 : vector<32x128xf32>
    %cst_18 = arith.constant dense<0.000000e+00> : vector<32x128xf32>
    %30 = tpu.matmul %25, %11, %cst_18 {dimension_numbers = #tpu.dot_dimension_numbers<[1], [0], [0], [1], [0, 0, 1, 1], [], []>} : vector<32x80xbf16>, vector<80x128xbf16>, vector<32x128xf32> -> vector<32x128xf32>
    %31 = arith.addf %21, %30 : vector<32x128xf32>
    %32 = vector.extract_strided_slice %8 {offsets = [0, 2, 0], sizes = [4, 8, 80], strides = [1, 1, 1]} : vector<6x10x80xbf16> to vector<4x8x80xbf16>
    %33 = vector.shape_cast %32 : vector<4x8x80xbf16> to vector<32x80xbf16>
    %34 = vector.extract_strided_slice %7 {offsets = [0, 2, 0], sizes = [4, 8, 80], strides = [1, 1, 1]} : vector<6x10x80xbf16> to vector<4x8x80xbf16>
    %35 = vector.shape_cast %34 : vector<4x8x80xbf16> to vector<32x80xbf16>
    %c0_19 = arith.constant 0 : index
    %c2 = arith.constant 2 : index
    %c0_20 = arith.constant 0 : index
    %c0_21 = arith.constant 0 : index
    %36 = vector.load %arg4[%c0_19, %c2, %c0_20, %c0_21] : memref<3x3x80x128xbf16, #tpu.memory_space<vmem>>, vector<1x1x80x128xbf16>
    %37 = vector.shape_cast %36 : vector<1x1x80x128xbf16> to vector<80x128xbf16>
    %cst_22 = arith.constant dense<0.000000e+00> : vector<32x128xf32>
    %38 = tpu.matmul %33, %37, %cst_22 {dimension_numbers = #tpu.dot_dimension_numbers<[1], [0], [0], [1], [0, 0, 1, 1], [], []>} : vector<32x80xbf16>, vector<80x128xbf16>, vector<32x128xf32> -> vector<32x128xf32>
    %39 = arith.addf %29, %38 : vector<32x128xf32>
    %cst_23 = arith.constant dense<0.000000e+00> : vector<32x128xf32>
    %40 = tpu.matmul %35, %11, %cst_23 {dimension_numbers = #tpu.dot_dimension_numbers<[1], [0], [0], [1], [0, 0, 1, 1], [], []>} : vector<32x80xbf16>, vector<80x128xbf16>, vector<32x128xf32> -> vector<32x128xf32>
    %41 = arith.addf %31, %40 : vector<32x128xf32>
    %42 = vector.extract_strided_slice %8 {offsets = [1, 0, 0], sizes = [4, 8, 80], strides = [1, 1, 1]} : vector<6x10x80xbf16> to vector<4x8x80xbf16>
    %43 = vector.shape_cast %42 : vector<4x8x80xbf16> to vector<32x80xbf16>
    %44 = vector.extract_strided_slice %7 {offsets = [1, 0, 0], sizes = [4, 8, 80], strides = [1, 1, 1]} : vector<6x10x80xbf16> to vector<4x8x80xbf16>
    %45 = vector.shape_cast %44 : vector<4x8x80xbf16> to vector<32x80xbf16>
    %c1_24 = arith.constant 1 : index
    %c0_25 = arith.constant 0 : index
    %c0_26 = arith.constant 0 : index
    %c0_27 = arith.constant 0 : index
    %46 = vector.load %arg4[%c1_24, %c0_25, %c0_26, %c0_27] : memref<3x3x80x128xbf16, #tpu.memory_space<vmem>>, vector<1x1x80x128xbf16>
    %47 = vector.shape_cast %46 : vector<1x1x80x128xbf16> to vector<80x128xbf16>
    %cst_28 = arith.constant dense<0.000000e+00> : vector<32x128xf32>
    %48 = tpu.matmul %43, %47, %cst_28 {dimension_numbers = #tpu.dot_dimension_numbers<[1], [0], [0], [1], [0, 0, 1, 1], [], []>} : vector<32x80xbf16>, vector<80x128xbf16>, vector<32x128xf32> -> vector<32x128xf32>
    %49 = arith.addf %39, %48 : vector<32x128xf32>
    %cst_29 = arith.constant dense<0.000000e+00> : vector<32x128xf32>
    %50 = tpu.matmul %45, %11, %cst_29 {dimension_numbers = #tpu.dot_dimension_numbers<[1], [0], [0], [1], [0, 0, 1, 1], [], []>} : vector<32x80xbf16>, vector<80x128xbf16>, vector<32x128xf32> -> vector<32x128xf32>
    %51 = arith.addf %41, %50 : vector<32x128xf32>
    %52 = vector.extract_strided_slice %8 {offsets = [1, 1, 0], sizes = [4, 8, 80], strides = [1, 1, 1]} : vector<6x10x80xbf16> to vector<4x8x80xbf16>
    %53 = vector.shape_cast %52 : vector<4x8x80xbf16> to vector<32x80xbf16>
    %54 = vector.extract_strided_slice %7 {offsets = [1, 1, 0], sizes = [4, 8, 80], strides = [1, 1, 1]} : vector<6x10x80xbf16> to vector<4x8x80xbf16>
    %55 = vector.shape_cast %54 : vector<4x8x80xbf16> to vector<32x80xbf16>
    %c1_30 = arith.constant 1 : index
    %c1_31 = arith.constant 1 : index
    %c0_32 = arith.constant 0 : index
    %c0_33 = arith.constant 0 : index
    %56 = vector.load %arg4[%c1_30, %c1_31, %c0_32, %c0_33] : memref<3x3x80x128xbf16, #tpu.memory_space<vmem>>, vector<1x1x80x128xbf16>
    %57 = vector.shape_cast %56 : vector<1x1x80x128xbf16> to vector<80x128xbf16>
    %cst_34 = arith.constant dense<0.000000e+00> : vector<32x128xf32>
    %58 = tpu.matmul %53, %57, %cst_34 {dimension_numbers = #tpu.dot_dimension_numbers<[1], [0], [0], [1], [0, 0, 1, 1], [], []>} : vector<32x80xbf16>, vector<80x128xbf16>, vector<32x128xf32> -> vector<32x128xf32>
    %59 = arith.addf %49, %58 : vector<32x128xf32>
    %cst_35 = arith.constant dense<0.000000e+00> : vector<32x128xf32>
    %60 = tpu.matmul %55, %11, %cst_35 {dimension_numbers = #tpu.dot_dimension_numbers<[1], [0], [0], [1], [0, 0, 1, 1], [], []>} : vector<32x80xbf16>, vector<80x128xbf16>, vector<32x128xf32> -> vector<32x128xf32>
    %61 = arith.addf %51, %60 : vector<32x128xf32>
    %62 = vector.extract_strided_slice %8 {offsets = [1, 2, 0], sizes = [4, 8, 80], strides = [1, 1, 1]} : vector<6x10x80xbf16> to vector<4x8x80xbf16>
    %63 = vector.shape_cast %62 : vector<4x8x80xbf16> to vector<32x80xbf16>
    %64 = vector.extract_strided_slice %7 {offsets = [1, 2, 0], sizes = [4, 8, 80], strides = [1, 1, 1]} : vector<6x10x80xbf16> to vector<4x8x80xbf16>
    %65 = vector.shape_cast %64 : vector<4x8x80xbf16> to vector<32x80xbf16>
    %c1_36 = arith.constant 1 : index
    %c2_37 = arith.constant 2 : index
    %c0_38 = arith.constant 0 : index
    %c0_39 = arith.constant 0 : index
    %66 = vector.load %arg4[%c1_36, %c2_37, %c0_38, %c0_39] : memref<3x3x80x128xbf16, #tpu.memory_space<vmem>>, vector<1x1x80x128xbf16>
    %67 = vector.shape_cast %66 : vector<1x1x80x128xbf16> to vector<80x128xbf16>
    %cst_40 = arith.constant dense<0.000000e+00> : vector<32x128xf32>
    %68 = tpu.matmul %63, %67, %cst_40 {dimension_numbers = #tpu.dot_dimension_numbers<[1], [0], [0], [1], [0, 0, 1, 1], [], []>} : vector<32x80xbf16>, vector<80x128xbf16>, vector<32x128xf32> -> vector<32x128xf32>
    %69 = arith.addf %59, %68 : vector<32x128xf32>
    %cst_41 = arith.constant dense<0.000000e+00> : vector<32x128xf32>
    %70 = tpu.matmul %65, %11, %cst_41 {dimension_numbers = #tpu.dot_dimension_numbers<[1], [0], [0], [1], [0, 0, 1, 1], [], []>} : vector<32x80xbf16>, vector<80x128xbf16>, vector<32x128xf32> -> vector<32x128xf32>
    %71 = arith.addf %61, %70 : vector<32x128xf32>
    %72 = vector.extract_strided_slice %8 {offsets = [2, 0, 0], sizes = [4, 8, 80], strides = [1, 1, 1]} : vector<6x10x80xbf16> to vector<4x8x80xbf16>
    %73 = vector.shape_cast %72 : vector<4x8x80xbf16> to vector<32x80xbf16>
    %74 = vector.extract_strided_slice %7 {offsets = [2, 0, 0], sizes = [4, 8, 80], strides = [1, 1, 1]} : vector<6x10x80xbf16> to vector<4x8x80xbf16>
    %75 = vector.shape_cast %74 : vector<4x8x80xbf16> to vector<32x80xbf16>
    %c2_42 = arith.constant 2 : index
    %c0_43 = arith.constant 0 : index
    %c0_44 = arith.constant 0 : index
    %c0_45 = arith.constant 0 : index
    %76 = vector.load %arg4[%c2_42, %c0_43, %c0_44, %c0_45] : memref<3x3x80x128xbf16, #tpu.memory_space<vmem>>, vector<1x1x80x128xbf16>
    %77 = vector.shape_cast %76 : vector<1x1x80x128xbf16> to vector<80x128xbf16>
    %cst_46 = arith.constant dense<0.000000e+00> : vector<32x128xf32>
    %78 = tpu.matmul %73, %77, %cst_46 {dimension_numbers = #tpu.dot_dimension_numbers<[1], [0], [0], [1], [0, 0, 1, 1], [], []>} : vector<32x80xbf16>, vector<80x128xbf16>, vector<32x128xf32> -> vector<32x128xf32>
    %79 = arith.addf %69, %78 : vector<32x128xf32>
    %cst_47 = arith.constant dense<0.000000e+00> : vector<32x128xf32>
    %80 = tpu.matmul %75, %11, %cst_47 {dimension_numbers = #tpu.dot_dimension_numbers<[1], [0], [0], [1], [0, 0, 1, 1], [], []>} : vector<32x80xbf16>, vector<80x128xbf16>, vector<32x128xf32> -> vector<32x128xf32>
    %81 = arith.addf %71, %80 : vector<32x128xf32>
    %82 = vector.extract_strided_slice %8 {offsets = [2, 1, 0], sizes = [4, 8, 80], strides = [1, 1, 1]} : vector<6x10x80xbf16> to vector<4x8x80xbf16>
    %83 = vector.shape_cast %82 : vector<4x8x80xbf16> to vector<32x80xbf16>
    %84 = vector.extract_strided_slice %7 {offsets = [2, 1, 0], sizes = [4, 8, 80], strides = [1, 1, 1]} : vector<6x10x80xbf16> to vector<4x8x80xbf16>
    %85 = vector.shape_cast %84 : vector<4x8x80xbf16> to vector<32x80xbf16>
    %c2_48 = arith.constant 2 : index
    %c1_49 = arith.constant 1 : index
    %c0_50 = arith.constant 0 : index
    %c0_51 = arith.constant 0 : index
    %86 = vector.load %arg4[%c2_48, %c1_49, %c0_50, %c0_51] : memref<3x3x80x128xbf16, #tpu.memory_space<vmem>>, vector<1x1x80x128xbf16>
    %87 = vector.shape_cast %86 : vector<1x1x80x128xbf16> to vector<80x128xbf16>
    %cst_52 = arith.constant dense<0.000000e+00> : vector<32x128xf32>
    %88 = tpu.matmul %83, %87, %cst_52 {dimension_numbers = #tpu.dot_dimension_numbers<[1], [0], [0], [1], [0, 0, 1, 1], [], []>} : vector<32x80xbf16>, vector<80x128xbf16>, vector<32x128xf32> -> vector<32x128xf32>
    %89 = arith.addf %79, %88 : vector<32x128xf32>
    %cst_53 = arith.constant dense<0.000000e+00> : vector<32x128xf32>
    %90 = tpu.matmul %85, %11, %cst_53 {dimension_numbers = #tpu.dot_dimension_numbers<[1], [0], [0], [1], [0, 0, 1, 1], [], []>} : vector<32x80xbf16>, vector<80x128xbf16>, vector<32x128xf32> -> vector<32x128xf32>
    %91 = arith.addf %81, %90 : vector<32x128xf32>
    %92 = vector.extract_strided_slice %8 {offsets = [2, 2, 0], sizes = [4, 8, 80], strides = [1, 1, 1]} : vector<6x10x80xbf16> to vector<4x8x80xbf16>
    %93 = vector.shape_cast %92 : vector<4x8x80xbf16> to vector<32x80xbf16>
    %94 = vector.extract_strided_slice %7 {offsets = [2, 2, 0], sizes = [4, 8, 80], strides = [1, 1, 1]} : vector<6x10x80xbf16> to vector<4x8x80xbf16>
    %95 = vector.shape_cast %94 : vector<4x8x80xbf16> to vector<32x80xbf16>
    %c2_54 = arith.constant 2 : index
    %c2_55 = arith.constant 2 : index
    %c0_56 = arith.constant 0 : index
    %c0_57 = arith.constant 0 : index
    %96 = vector.load %arg4[%c2_54, %c2_55, %c0_56, %c0_57] : memref<3x3x80x128xbf16, #tpu.memory_space<vmem>>, vector<1x1x80x128xbf16>
    %97 = vector.shape_cast %96 : vector<1x1x80x128xbf16> to vector<80x128xbf16>
    %cst_58 = arith.constant dense<0.000000e+00> : vector<32x128xf32>
    %98 = tpu.matmul %93, %97, %cst_58 {dimension_numbers = #tpu.dot_dimension_numbers<[1], [0], [0], [1], [0, 0, 1, 1], [], []>} : vector<32x80xbf16>, vector<80x128xbf16>, vector<32x128xf32> -> vector<32x128xf32>
    %99 = arith.addf %89, %98 : vector<32x128xf32>
    %cst_59 = arith.constant dense<0.000000e+00> : vector<32x128xf32>
    %100 = tpu.matmul %95, %11, %cst_59 {dimension_numbers = #tpu.dot_dimension_numbers<[1], [0], [0], [1], [0, 0, 1, 1], [], []>} : vector<32x80xbf16>, vector<80x128xbf16>, vector<32x128xf32> -> vector<32x128xf32>
    %101 = arith.addf %91, %100 : vector<32x128xf32>
    %cst_60 = arith.constant 0.000000e+00 : f32
    %cst_61 = arith.constant 1.000000e+00 : f32
    %102 = vector.broadcast %cst_60 : f32 to vector<32x128xf32>
    %103 = arith.maximumf %102, %101 : vector<32x128xf32>
    %104 = vector.broadcast %cst_61 : f32 to vector<32x128xf32>
    %105 = arith.minimumf %104, %103 : vector<32x128xf32>
    %cst_62 = arith.constant 9.99999993E-9 : f32
    %106 = vector.broadcast %cst_62 : f32 to vector<32x128xf32>
    %107 = arith.addf %101, %106 : vector<32x128xf32>
    %108 = tpu.reciprocal %107 {approx = true} : vector<32x128xf32> -> vector<32x128xf32>
    %cst_63 = arith.constant 2.160000e+02 : f32
    %109 = vector.broadcast %cst_63 : f32 to vector<32x128xf32>
    %110 = arith.mulf %109, %108 : vector<32x128xf32>
    %111 = arith.mulf %110, %105 : vector<32x128xf32>
    %112 = arith.mulf %99, %111 : vector<32x128xf32>
    %c0_64 = arith.constant 0 : index
    %c0_65 = arith.constant 0 : index
    %113 = vector.load %arg6[%c0_64, %c0_65] : memref<1x128xf32, #tpu.memory_space<vmem>>, vector<1x128xf32>
    %114 = vector.broadcast %113 : vector<1x128xf32> to vector<32x128xf32>
    %115 = arith.addf %112, %114 : vector<32x128xf32>
    %116 = arith.mulf %115, %105 : vector<32x128xf32>
    %cst_66 = arith.constant 0.000000e+00 : f32
    %117 = vector.broadcast %cst_66 : f32 to vector<32x128xf32>
    %118 = arith.cmpf oge, %116, %117 : vector<32x128xf32>
    %cst_67 = arith.constant 0.00999999977 : f32
    %119 = vector.broadcast %cst_67 : f32 to vector<32x128xf32>
    %120 = arith.mulf %119, %116 : vector<32x128xf32>
    %121 = arith.select %118, %116, %120 : vector<32x128xi1>, vector<32x128xf32>
    %c0_68 = arith.constant 0 : index
    %c0_69 = arith.constant 0 : index
    %c0_70 = arith.constant 0 : index
    %122 = vector.load %arg7[%c0_68, %c0_69, %c0_70] : memref<1x32x128xf32, #tpu.memory_space<vmem>>, vector<1x32x128xf32>
    %123 = vector.shape_cast %122 : vector<1x32x128xf32> to vector<32x128xf32>
    %124 = vector.shape_cast %121 : vector<32x128xf32> to vector<1x32x128xf32>
    tpu.vector_store %arg7[%c0_68, %c0_69, %c0_70], %124 {strides = array<i32>} : memref<1x32x128xf32, #tpu.memory_space<vmem>>, vector<1x32x128xf32>,
    %c0_71 = arith.constant 0 : index
    %c0_72 = arith.constant 0 : index
    %c0_73 = arith.constant 0 : index
    %125 = vector.load %arg8[%c0_71, %c0_72, %c0_73] : memref<1x32x128xf32, #tpu.memory_space<vmem>>, vector<1x32x128xf32>
    %126 = vector.shape_cast %125 : vector<1x32x128xf32> to vector<32x128xf32>
    %127 = vector.shape_cast %105 : vector<32x128xf32> to vector<1x32x128xf32>
    tpu.vector_store %arg8[%c0_71, %c0_72, %c0_73], %127 {strides = array<i32>} : memref<1x32x128xf32, #tpu.memory_space<vmem>>, vector<1x32x128xf32>,
    return
  }
  func.func @transform_0(%arg0: i32, %arg1: i32) -> (i32, i32, i32, i32) {
    %c0_i32 = arith.constant 0 : i32
    %c0_i32_0 = arith.constant 0 : i32
    %c0_i32_1 = arith.constant 0 : i32
    %c0_i32_2 = arith.constant 0 : i32
    return %arg0, %c0_i32, %c0_i32_0, %c0_i32_1 : i32, i32, i32, i32
  }
  func.func @transform_1(%arg0: i32, %arg1: i32) -> (i32, i32, i32, i32) {
    %c0_i32 = arith.constant 0 : i32
    %c0_i32_0 = arith.constant 0 : i32
    %c0_i32_1 = arith.constant 0 : i32
    %c0_i32_2 = arith.constant 0 : i32
    return %arg0, %c0_i32, %c0_i32_0, %c0_i32_1 : i32, i32, i32, i32
  }
  func.func @transform_2(%arg0: i32, %arg1: i32) -> (i32, i32, i32, i32) {
    %c0_i32 = arith.constant 0 : i32
    %c0_i32_0 = arith.constant 0 : i32
    %c0_i32_1 = arith.constant 0 : i32
    %c0_i32_2 = arith.constant 0 : i32
    %c0_i32_3 = arith.constant 0 : i32
    return %c0_i32, %c0_i32_0, %c0_i32_1, %c0_i32_2 : i32, i32, i32, i32
  }
  func.func @transform_3(%arg0: i32, %arg1: i32) -> (i32, i32) {
    %c0_i32 = arith.constant 0 : i32
    %c0_i32_0 = arith.constant 0 : i32
    %c0_i32_1 = arith.constant 0 : i32
    return %c0_i32, %c0_i32_0 : i32, i32
  }
  func.func @transform_4(%arg0: i32, %arg1: i32) -> (i32, i32) {
    %c0_i32 = arith.constant 0 : i32
    %c0_i32_0 = arith.constant 0 : i32
    %c0_i32_1 = arith.constant 0 : i32
    return %c0_i32, %c0_i32_0 : i32, i32
  }
  func.func @transform_5(%arg0: i32, %arg1: i32) -> (i32, i32, i32) {
    %c0_i32 = arith.constant 0 : i32
    %c0_i32_0 = arith.constant 0 : i32
    return %arg0, %arg1, %c0_i32 : i32, i32, i32
  }
  func.func @transform_6(%arg0: i32, %arg1: i32) -> (i32, i32, i32) {
    %c0_i32 = arith.constant 0 : i32
    %c0_i32_0 = arith.constant 0 : i32
    return %arg0, %arg1, %c0_i32 : i32, i32, i32
  }
}

</mosaic_0001>

<llo_original>
// kernel: tpu_custom_call.1
$region0: #{tpu_custom_call.1}
  #allocation0 [shape = 'u32[]', space=smem, size = 0x4, offset = 0x4, fixed_abs, tag = 'smem constant byte address 0x4 - core index']
  #allocation1 [shape = 'u32[144,128]{1,0:T(1,128)}', space=vmem, size = 0x12000, scoped, tag = 'internal scratch']
  %s0 = inlined_call_operand.vmem [shape: bf16[2,10,10,80], index: 0, kind: input, shape index: {}]
  %s1 = inlined_call_operand.vmem [shape: bf16[2,10,10,80], index: 1, kind: input, shape index: {}]
  %s2 = inlined_call_operand.vmem [shape: bf16[3,3,80,128], index: 2, kind: input, shape index: {}]
  %s3 = inlined_call_operand.vmem [shape: bf16[80,128], index: 3, kind: input, shape index: {}]
  %s4 = inlined_call_operand.vmem [shape: f32[1,128], index: 4, kind: input, shape index: {}]
  %s5 = inlined_call_operand.hbm [shape: f32[2,64,128], index: 5, kind: output, shape index: {0}]
  %s6 = inlined_call_operand.hbm [shape: f32[2,64,128], index: 6, kind: output, shape index: {1}]
  %7 = xla_tuple %s5, %s6
  %s8 = sld [smem:[#allocation0]]
  $region61: #{tpu_custom_call.1} parent=0
    _
  %s10 = ssub.s32 1, %s8
  %s11 = scalar_select 0, %s10, %s8
  $region1: #{tpu_custom_call.1} parent=0
    #allocation2 [shape = 'u8[32768]{0}', space=vmem, size = 0x8000, scoped, tag = 'output window, operand 0']
    #allocation3 [shape = 's32[2]{0}', space=sflag, size = 0x8, scoped, tag = 'scoped memory for tpu_custom_call.1']
    #allocation4 [shape = 'u8[32768]{0}', space=vmem, size = 0x8000, scoped, tag = 'output window, operand 1']
    #allocation5 [shape = 's32[2]{0}', space=sflag, size = 0x8, scoped, tag = 'scoped memory for tpu_custom_call.1']
    %12 = vsyncpa [#allocation3], 0
    %s13 = scalar_lea.sflag [#allocation3], 1
    %14 = vsyncpa %s13, 0
    %15 = vsyncpa [#allocation5], 0
    %s16 = scalar_lea.sflag [#allocation5], 1
    %17 = vsyncpa %s16, 0
    loop: start=0, step=1, limit=6
    $region2: #{tpu_custom_call.1} parent=1 // loop_pre_header
      _
    $region3: #{tpu_custom_call.1} parent=1 // loop_header
      %s19 = sphi 0, %s23
      %p20 = scmp.ge.s32.totalorder %s19, 6
      %s26 = sphi 0, %s38
      %s27 = sphi 0, %s34
      %s28 = sphi 0, %s26
      %s29 = sphi 0, %s27
      %s30 = sphi 0, %s28
      %s31 = sphi 0, %s29
      %s41 = sphi 0, %s43
      %s44 = sphi 0, %s41
      %s45 = sphi 0, %s44
      %s61 = sphi 0, %s45
      %s67 = sphi 0, %s69
      %s70 = sphi 0, %s67
      %s71 = sphi 0, %s70
      %s87 = sphi 0, %s71
      %s91 = sphi 0, %s91
      %s93 = sphi 0, %s91
      %s94 = sphi 0, %s93
      %s108 = sphi 0, %s94
      %s112 = sphi 0, %s112
      %s114 = sphi 0, %s112
      %s115 = sphi 0, %s114
      %s129 = sphi 0, %s115
      %s133 = sphi 0, %s133
      %s135 = sphi 0, %s133
      %s136 = sphi 0, %s135
      %s150 = sphi 0, %s136
      %s158 = sphi 0, %s160
      %s161 = sphi 0, %s158
      %s162 = sphi 0, %s161
      %s178 = sphi 0, %s162
      %s186 = sphi 0, %s188
      %s189 = sphi 0, %s186
      %s190 = sphi 0, %s189
      %s206 = sphi 0, %s190
    $region4: #{tpu_custom_call.1} parent=1 // loop_header_branch
      %22 = sbr.rel (%p20) target = $region8
    $region5: #{tpu_custom_call.1} parent=1 // loop_body
      %s24 = ssub.s32 %s19, 1
      %s25 = ssub.s32 %s19, 2
      %s32 = sadd.s32 1, %s27
      %p33 = scmp.ge.s32.totalorder %s32, 2
      %s34 = scalar_select %p33, 0, %s32
      %s35 = sadd.s32 1, %s26
      %s36 = scalar_select %p33, %s35, %s26
      %p37 = scmp.ge.s32.totalorder %s36, 2
      %s38 = scalar_select %p37, 0, %s36
      %s39 = ssub.s32 %s26, %s38
      %p40 = scmp.eq.s32.totalorder %s39, 0
      %s42 = sadd.s32 %s41, 1
      %s43 = scalar_select %p40, %s41, %s42
      %p46 = pneg %p40
      %p47 = scmp.eq.s32.totalorder %s19, 3
      %p48 = por %p46, %p47
      %p49 = scmp.ne.s32.totalorder %s41, %s44
      %p50 = scmp.eq.s32.totalorder %s19, 0
      %p51 = por %p49, %p50
      %p52 = scmp.ne.s32.totalorder %s41, %s44
      %p53 = scmp.eq.s32.totalorder %s24, 3
      %p54 = por %p52, %p53
      %p55 = scmp.ne.s32.totalorder %s44, %s45
      %p56 = scmp.eq.s32.totalorder %s24, 0
      %p57 = por %p55, %p56
      %p58 = scmp.ne.s32.totalorder %s44, %s45
      %p59 = scmp.eq.s32.totalorder %s25, 3
      %p60 = por %p58, %p59
      %p62 = scmp.ne.s32.totalorder %s45, %s61
      %p63 = scmp.eq.s32.totalorder %s25, 0
      %p64 = por %p62, %p63
      %s65 = ssub.s32 %s26, %s38
      %p66 = scmp.eq.s32.totalorder %s65, 0
      %s68 = sadd.s32 %s67, 1
      %s69 = scalar_select %p66, %s67, %s68
      %p72 = pneg %p66
      %p73 = scmp.eq.s32.totalorder %s19, 3
      %p74 = por %p72, %p73
      %p75 = scmp.ne.s32.totalorder %s67, %s70
      %p76 = scmp.eq.s32.totalorder %s19, 0
      %p77 = por %p75, %p76
      %p78 = scmp.ne.s32.totalorder %s67, %s70
      %p79 = scmp.eq.s32.totalorder %s24, 3
      %p80 = por %p78, %p79
      %p81 = scmp.ne.s32.totalorder %s70, %s71
      %p82 = scmp.eq.s32.totalorder %s24, 0
      %p83 = por %p81, %p82
      %p84 = scmp.ne.s32.totalorder %s70, %s71
      %p85 = scmp.eq.s32.totalorder %s25, 3
      %p86 = por %p84, %p85
      %p88 = scmp.ne.s32.totalorder %s71, %s87
      %p89 = scmp.eq.s32.totalorder %s25, 0
      %p90 = por %p88, %p89
      %s92 = sadd.s32 %s91, 1
      %p95 = scmp.eq.s32.totalorder %s19, 3
      %p96 = scmp.ne.s32.totalorder %s91, %s93
      %p97 = scmp.eq.s32.totalorder %s19, 0
      %p98 = por %p96, %p97
      %p99 = scmp.ne.s32.totalorder %s91, %s93
      %p100 = scmp.eq.s32.totalorder %s24, 3
      %p101 = por %p99, %p100
      %p102 = scmp.ne.s32.totalorder %s93, %s94
      %p103 = scmp.eq.s32.totalorder %s24, 0
      %p104 = por %p102, %p103
      %p105 = scmp.ne.s32.totalorder %s93, %s94
      %p106 = scmp.eq.s32.totalorder %s25, 3
      %p107 = por %p105, %p106
      %p109 = scmp.ne.s32.totalorder %s94, %s108
      %p110 = scmp.eq.s32.totalorder %s25, 0
      %p111 = por %p109, %p110
      %s113 = sadd.s32 %s112, 1
      %p116 = scmp.eq.s32.totalorder %s19, 3
      %p117 = scmp.ne.s32.totalorder %s112, %s114
      %p118 = scmp.eq.s32.totalorder %s19, 0
      %p119 = por %p117, %p118
      %p120 = scmp.ne.s32.totalorder %s112, %s114
      %p121 = scmp.eq.s32.totalorder %s24, 3
      %p122 = por %p120, %p121
      %p123 = scmp.ne.s32.totalorder %s114, %s115
      %p124 = scmp.eq.s32.totalorder %s24, 0
      %p125 = por %p123, %p124
      %p126 = scmp.ne.s32.totalorder %s114, %s115
      %p127 = scmp.eq.s32.totalorder %s25, 3
      %p128 = por %p126, %p127
      %p130 = scmp.ne.s32.totalorder %s115, %s129
      %p131 = scmp.eq.s32.totalorder %s25, 0
      %p132 = por %p130, %p131
      %s134 = sadd.s32 %s133, 1
      %p137 = scmp.eq.s32.totalorder %s19, 3
      %p138 = scmp.ne.s32.totalorder %s133, %s135
      %p139 = scmp.eq.s32.totalorder %s19, 0
      %p140 = por %p138, %p139
      %p141 = scmp.ne.s32.totalorder %s133, %s135
      %p142 = scmp.eq.s32.totalorder %s24, 3
      %p143 = por %p141, %p142
      %p144 = scmp.ne.s32.totalorder %s135, %s136
      %p145 = scmp.eq.s32.totalorder %s24, 0
      %p146 = por %p144, %p145
      %p147 = scmp.ne.s32.totalorder %s135, %s136
      %p148 = scmp.eq.s32.totalorder %s25, 3
      %p149 = por %p147, %p148
      %p151 = scmp.ne.s32.totalorder %s136, %s150
      %p152 = scmp.eq.s32.totalorder %s25, 0
      %p153 = por %p151, %p152
      %s154 = ssub.s32 %s26, %s38
      %s155 = ssub.s32 %s27, %s34
      %s156 = sor.u32 %s154, %s155
      %p157 = scmp.eq.s32.totalorder %s156, 0
      %s159 = sadd.s32 %s158, 1
      %s160 = scalar_select %p157, %s158, %s159
      %p163 = pneg %p157
      %p164 = scmp.eq.s32.totalorder %s19, 3
      %p165 = por %p163, %p164
      %p166 = scmp.ne.s32.totalorder %s158, %s161
      %p167 = scmp.eq.s32.totalorder %s19, 0
      %p168 = por %p166, %p167
      %p169 = scmp.ne.s32.totalorder %s158, %s161
      %p170 = scmp.eq.s32.totalorder %s24, 3
      %p171 = por %p169, %p170
      %p172 = scmp.ne.s32.totalorder %s161, %s162
      %p173 = scmp.eq.s32.totalorder %s24, 0
      %p174 = por %p172, %p173
      %p175 = scmp.ne.s32.totalorder %s161, %s162
      %p176 = scmp.eq.s32.totalorder %s25, 3
      %p177 = por %p175, %p176
      %p179 = scmp.ne.s32.totalorder %s162, %s178
      %p180 = scmp.eq.s32.totalorder %s25, 0
      %p181 = por %p179, %p180
      %s182 = ssub.s32 %s26, %s38
      %s183 = ssub.s32 %s27, %s34
      %s184 = sor.u32 %s182, %s183
      %p185 = scmp.eq.s32.totalorder %s184, 0
      %s187 = sadd.s32 %s186, 1
      %s188 = scalar_select %p185, %s186, %s187
      %p191 = pneg %p185
      %p192 = scmp.eq.s32.totalorder %s19, 3
      %p193 = por %p191, %p192
      %p194 = scmp.ne.s32.totalorder %s186, %s189
      %p195 = scmp.eq.s32.totalorder %s19, 0
      %p196 = por %p194, %p195
      %p197 = scmp.ne.s32.totalorder %s186, %s189
      %p198 = scmp.eq.s32.totalorder %s24, 3
      %p199 = por %p197, %p198
      %p200 = scmp.ne.s32.totalorder %s189, %s190
      %p201 = scmp.eq.s32.totalorder %s24, 0
      %p202 = por %p200, %p201
      %p203 = scmp.ne.s32.totalorder %s189, %s190
      %p204 = scmp.eq.s32.totalorder %s25, 3
      %p205 = por %p203, %p204
      %p207 = scmp.ne.s32.totalorder %s190, %s206
      %p208 = scmp.eq.s32.totalorder %s25, 0
      %p209 = por %p207, %p208
      %p210 = scmp.le.s32.totalorder 1, %s19
      %p211 = scmp.lt.s32.totalorder %s19, 5
      %p212 = pnand %p210, %p211
      %p213 = pneg %p212
      // Predicated region
      $region9: #{tpu_custom_call.1} parent=5 // pred_check
        _
      $region10: #{tpu_custom_call.1} parent=5 // pred_check_branch
        %215 = sbr.rel (%p212) target = $region12
      $region11: #{tpu_custom_call.1} parent=5 // pred_region
        %s216 = ssub.s32 %s19, 1
        // Predicated region
        $region13: #{tpu_custom_call.1} parent=11 // pred_check
          %p217 = pneg %p104
        $region14: #{tpu_custom_call.1} parent=11 // pred_check_branch
          %219 = sbr.rel (%p217) target = $region16
        $region15: #{tpu_custom_call.1} parent=11 // pred_region
          _
        $region16: #{tpu_custom_call.1} parent=11 // pred_fallthru
          _
        // Predicated region
        $region17: #{tpu_custom_call.1} parent=11 // pred_check
          %p220 = pneg %p125
        $region18: #{tpu_custom_call.1} parent=11 // pred_check_branch
          %222 = sbr.rel (%p220) target = $region20
        $region19: #{tpu_custom_call.1} parent=11 // pred_region
          _
        $region20: #{tpu_custom_call.1} parent=11 // pred_fallthru
          _
        // Predicated region
        $region21: #{tpu_custom_call.1} parent=11 // pred_check
          %p223 = pneg %p146
        $region22: #{tpu_custom_call.1} parent=11 // pred_check_branch
          %225 = sbr.rel (%p223) target = $region24
        $region23: #{tpu_custom_call.1} parent=11 // pred_region
          _
        $region24: #{tpu_custom_call.1} parent=11 // pred_fallthru
          _
      $region12: #{tpu_custom_call.1} parent=5 // pred_fallthru
        _
      %p226 = scmp.lt.s32.totalorder %s19, 4
      // Predicated region
      $region25: #{tpu_custom_call.1} parent=5 // pred_check
        %p227 = pneg %p226
      $region26: #{tpu_custom_call.1} parent=5 // pred_check_branch
        %229 = sbr.rel (%p227) target = $region28
      $region27: #{tpu_custom_call.1} parent=5 // pred_region
        // Predicated region
        $region29: #{tpu_custom_call.1} parent=27 // pred_check
          %p230 = pneg %p51
        $region30: #{tpu_custom_call.1} parent=27 // pred_check_branch
          %232 = sbr.rel (%p230) target = $region32
        $region31: #{tpu_custom_call.1} parent=27 // pred_region
          %p233 = scmp.lt.s32.totalorder %s26, 1
          %s234 = scalar_select %p233, %s26, 1
          %s235 = smul.addr %s234, 20
          %s236 = smul.addr %s235, 4
          %s237 = scalar_lea.vmem %s0, %s236
        $region32: #{tpu_custom_call.1} parent=27 // pred_fallthru
          _
        // Predicated region
        $region33: #{tpu_custom_call.1} parent=27 // pred_check
          %p238 = pneg %p77
        $region34: #{tpu_custom_call.1} parent=27 // pred_check_branch
          %240 = sbr.rel (%p238) target = $region36
        $region35: #{tpu_custom_call.1} parent=27 // pred_region
          %p241 = scmp.lt.s32.totalorder %s26, 1
          %s242 = scalar_select %p241, %s26, 1
          %s243 = smul.addr %s242, 20
          %s244 = smul.addr %s243, 4
          %s245 = scalar_lea.vmem %s1, %s244
        $region36: #{tpu_custom_call.1} parent=27 // pred_fallthru
          _
      $region28: #{tpu_custom_call.1} parent=5 // pred_fallthru
        _
      %p246 = scmp.le.s32.totalorder 1, %s19
      %p247 = scmp.lt.s32.totalorder %s19, 5
      %p248 = pnand %p246, %p247
      %p249 = pneg %p248
      // Predicated region
      $region37: #{tpu_custom_call.1} parent=5 // pred_check
        _
      $region38: #{tpu_custom_call.1} parent=5 // pred_check_branch
        %251 = sbr.rel (%p248) target = $region40
      $region39: #{tpu_custom_call.1} parent=5 // pred_region
        %s252 = ssub.s32 %s19, 1
        %p253 = scmp.lt.s32.totalorder %s28, 1
        %s254 = scalar_select %p253, %s28, 1
        %s255 = smul.addr %s254, 20
        %s256 = smul.addr %s255, 4
        %s257 = scalar_lea.vmem %s0, %s256
        %p258 = pneg %p57
        %p259 = pneg %p54
        %p260 = scmp.lt.s32.totalorder %s28, 1
        %s261 = scalar_select %p260, %s28, 1
        %s262 = smul.addr %s261, 20
        %s263 = smul.addr %s262, 4
        %s264 = scalar_lea.vmem %s1, %s263
        %p265 = pneg %p83
        %p266 = pneg %p80
        %p267 = pneg %p104
        %p268 = pneg %p101
        %p269 = pneg %p125
        %p270 = pneg %p122
        %p271 = pneg %p146
        %p272 = pneg %p143
        %p273 = pneg %p174
        %p274 = pneg %p171
        %s275 = sand.u32 %s161, 1
        %s276 = scalar_lea.sflag [#allocation3], %s275
        %s277 = sand.u32 %s161, 1
        %s278 = smul.addr %s277, 32
        %s279 = scalar_lea.vmem [#allocation2], %s278
        %p280 = pneg %p202
        %p281 = pneg %p199
        %s282 = sand.u32 %s189, 1
        %s283 = scalar_lea.sflag [#allocation5], %s282
        %s284 = sand.u32 %s189, 1
        %s285 = smul.addr %s284, 32
        %s286 = scalar_lea.vmem [#allocation4], %s285
        %p287 = scmp.lt.s32.totalorder %s28, 1
        %s288 = scalar_select %p287, %s28, 1
        %s289 = smul.addr %s288, 20
        %s290 = smul.addr %s289, 4
        %s291 = scalar_lea.vmem %s0, %s290
        %p292 = scmp.lt.s32.totalorder %s28, 1
        %s293 = scalar_select %p292, %s28, 1
        %s294 = smul.addr %s293, 20
        %s295 = smul.addr %s294, 4
        %s296 = scalar_lea.vmem %s1, %s295
        %s297 = smul.u32 4, %s29
        %s298 = smul.u32 4, %s29
        %s300 = smul.u32 %s29, 4
        %s301 = smul.u32 %s300, 2
        %s302 = smul.addr %s301, 4
        %s303 = scalar_lea.vmem %s291, %s302
        %v304 = vld [vmem:[%s303] sm:$0xf]
        %v305 = vld [vmem:[%s303 + $0x4] sm:$0x1]
        %v306 = vld [vmem:[%s303 + $0x8] sm:$0xf]
        %v307 = vld [vmem:[%s303 + $0xc] sm:$0x1]
        %v308 = vld [vmem:[%s303 + $0x10] sm:$0xf]
        %v309 = vld [vmem:[%s303 + $0x14] sm:$0x1]
        %v310 = vld [vmem:[%s303 + $0x18] sm:$0xf]
        %v311 = vld [vmem:[%s303 + $0x1c] sm:$0x1]
        %v312 = vld [vmem:[%s303 + $0x20] sm:$0xf]
        %v313 = vld [vmem:[%s303 + $0x24] sm:$0x1]
        %v314 = vld [vmem:[%s303 + $0x28] sm:$0xf]
        %v315 = vld [vmem:[%s303 + $0x2c] sm:$0x1]
        %s316 = smul.addr %s301, 4
        %s317 = scalar_lea.vmem %s296, %s316
        %v318 = vld [vmem:[%s317] sm:$0xf]
        %v319 = vld [vmem:[%s317 + $0x4] sm:$0x1]
        %v320 = vld [vmem:[%s317 + $0x8] sm:$0xf]
        %v321 = vld [vmem:[%s317 + $0xc] sm:$0x1]
        %v322 = vld [vmem:[%s317 + $0x10] sm:$0xf]
        %v323 = vld [vmem:[%s317 + $0x14] sm:$0x1]
        %v324 = vld [vmem:[%s317 + $0x18] sm:$0xf]
        %v325 = vld [vmem:[%s317 + $0x1c] sm:$0x1]
        %v326 = vld [vmem:[%s317 + $0x20] sm:$0xf]
        %v327 = vld [vmem:[%s317 + $0x24] sm:$0x1]
        %v328 = vld [vmem:[%s317 + $0x28] sm:$0xf]
        %v329 = vld [vmem:[%s317 + $0x2c] sm:$0x1]
        %v330 = vmul.bf16 %v304, %v318
        %v331 = vmul.bf16 %v305, %v319
        %v332 = vmul.bf16 %v306, %v320
        %v333 = vmul.bf16 %v307, %v321
        %v334 = vmul.bf16 %v308, %v322
        %v335 = vmul.bf16 %v309, %v323
        %v336 = vmul.bf16 %v310, %v324
        %v337 = vmul.bf16 %v311, %v325
        %v338 = vmul.bf16 %v312, %v326
        %v339 = vmul.bf16 %v313, %v327
        %v340 = vmul.bf16 %v314, %v328
        %v341 = vmul.bf16 %v315, %v329
        %v342 = vld [vmem:[%s3] sm:$0xf]
        %v343 = vld [vmem:[%s3 + $0x4] sm:$0xf]
        %v344 = vld [vmem:[%s3 + $0x8] sm:$0xf]
        %v345 = vld [vmem:[%s3 + $0xc] sm:$0xf]
        %v346 = vld [vmem:[%s3 + $0x10] sm:$0xf]
        %v347 = vld [vmem:[%s3 + $0x14] sm:$0xf]
        %v348 = vld [vmem:[%s3 + $0x18] sm:$0xf]
        %v349 = vld [vmem:[%s3 + $0x1c] sm:$0xf]
        %v350 = vld [vmem:[%s3 + $0x20] sm:$0xf]
        %v351 = vld [vmem:[%s3 + $0x24] sm:$0xf]
        %v352 = vld [vmem:[%s2] sm:$0xf]
        %v353 = vld [vmem:[%s2 + $0x4] sm:$0xf]
        %v354 = vld [vmem:[%s2 + $0x8] sm:$0xf]
        %v355 = vld [vmem:[%s2 + $0xc] sm:$0xf]
        %v356 = vld [vmem:[%s2 + $0x10] sm:$0xf]
        %v357 = vld [vmem:[%s2 + $0x14] sm:$0xf]
        %v358 = vld [vmem:[%s2 + $0x18] sm:$0xf]
        %v359 = vld [vmem:[%s2 + $0x1c] sm:$0xf]
        %v360 = vld [vmem:[%s2 + $0x20] sm:$0xf]
        %v361 = vld [vmem:[%s2 + $0x24] sm:$0xf]
        %vm362 = vsmask.f32 3328
        %vm363 = vsmask.f32 7440
        %vm364 = vmor %vm362, %vm363
        %v366 = vshrl.u32 %v330, 16
        %v368 = vrot.slane %v366, 4
        %v369 = vshll.u32 %v330, 16
        %v371 = vrot.slane %v369, 5
        %v372 = vor.u32 %v368, %v371
        %v373 = vrot.slane %v372, 4
        %v375 = vshll.u32 %v331, 16
        %v377 = vrot.slane %v375, 5
        %v378 = vsel %vm364, %v373, %v377
        %v380 = vshrl.u32 %v332, 16
        %v382 = vrot.slane %v380, 4
        %v383 = vshll.u32 %v332, 16
        %v385 = vrot.slane %v383, 5
        %v386 = vor.u32 %v382, %v385
        %v387 = vrot.slane %v386, 4
        %v389 = vshll.u32 %v333, 16
        %v391 = vrot.slane %v389, 5
        %v392 = vsel %vm364, %v387, %v391
        %v394 = vshrl.u32 %v334, 16
        %v396 = vrot.slane %v394, 4
        %v397 = vshll.u32 %v334, 16
        %v399 = vrot.slane %v397, 5
        %v400 = vor.u32 %v396, %v399
        %v401 = vrot.slane %v400, 4
        %v403 = vshll.u32 %v335, 16
        %v405 = vrot.slane %v403, 5
        %v406 = vsel %vm364, %v401, %v405
        %v408 = vshrl.u32 %v336, 16
        %v410 = vrot.slane %v408, 4
        %v411 = vshll.u32 %v336, 16
        %v413 = vrot.slane %v411, 5
        %v414 = vor.u32 %v410, %v413
        %v415 = vrot.slane %v414, 4
        %v417 = vshll.u32 %v337, 16
        %v419 = vrot.slane %v417, 5
        %v420 = vsel %vm364, %v415, %v419
        %v422 = vshrl.u32 %v318, 16
        %v424 = vrot.slane %v422, 4
        %v425 = vshll.u32 %v318, 16
        %v427 = vrot.slane %v425, 5
        %v428 = vor.u32 %v424, %v427
        %v429 = vrot.slane %v428, 4
        %v431 = vshll.u32 %v319, 16
        %v433 = vrot.slane %v431, 5
        %v434 = vsel %vm364, %v429, %v433
        %v436 = vshrl.u32 %v320, 16
        %v438 = vrot.slane %v436, 4
        %v439 = vshll.u32 %v320, 16
        %v441 = vrot.slane %v439, 5
        %v442 = vor.u32 %v438, %v441
        %v443 = vrot.slane %v442, 4
        %v445 = vshll.u32 %v321, 16
        %v447 = vrot.slane %v445, 5
        %v448 = vsel %vm364, %v443, %v447
        %v450 = vshrl.u32 %v322, 16
        %v452 = vrot.slane %v450, 4
        %v453 = vshll.u32 %v322, 16
        %v455 = vrot.slane %v453, 5
        %v456 = vor.u32 %v452, %v455
        %v457 = vrot.slane %v456, 4
        %v459 = vshll.u32 %v323, 16
        %v461 = vrot.slane %v459, 5
        %v462 = vsel %vm364, %v457, %v461
        %v464 = vshrl.u32 %v324, 16
        %v466 = vrot.slane %v464, 4
        %v467 = vshll.u32 %v324, 16
        %v469 = vrot.slane %v467, 5
        %v470 = vor.u32 %v466, %v469
        %v471 = vrot.slane %v470, 4
        %v473 = vshll.u32 %v325, 16
        %v475 = vrot.slane %v473, 5
        %v476 = vsel %vm364, %v471, %v475
        %s477 = scalar_lea.vmem %s2, 40
        %v478 = vld [vmem:[%s477] sm:$0xf]
        %v479 = vld [vmem:[%s477 + $0x4] sm:$0xf]
        %v480 = vld [vmem:[%s477 + $0x8] sm:$0xf]
        %v481 = vld [vmem:[%s477 + $0xc] sm:$0xf]
        %v482 = vld [vmem:[%s477 + $0x10] sm:$0xf]
        %v483 = vld [vmem:[%s477 + $0x14] sm:$0xf]
        %v484 = vld [vmem:[%s477 + $0x18] sm:$0xf]
        %v485 = vld [vmem:[%s477 + $0x1c] sm:$0xf]
        %v486 = vld [vmem:[%s477 + $0x20] sm:$0xf]
        %v487 = vld [vmem:[%s477 + $0x24] sm:$0xf]
        %v488 = vunpack.c.l.b16 %v378
        %v489 = vunpack.c.l.b16 %v392
        %v490 = vunpack.c.l.b16 %v406
        %v491 = vunpack.c.l.b16 %v420
        %v492 = vpack.c.b16 %v489, %v488
        %v493 = vpack.c.b16 %v491, %v490
        %v504 = vunpack.c.l.b16 %v478
        %v505 = vunpack.c.l.b16 %v479
        %v506 = vunpack.c.l.b16 %v480
        %v507 = vunpack.c.l.b16 %v481
        %v508 = vunpack.c.l.b16 %v482
        %v509 = vunpack.c.l.b16 %v483
        %v510 = vunpack.c.l.b16 %v484
        %v511 = vunpack.c.l.b16 %v485
        %v512 = vunpack.c.l.b16 %v486
        %v513 = vunpack.c.l.b16 %v487
        %v514 = vpack.c.b16 %v505, %v504
        %v515 = vpack.c.b16 %v507, %v506
        %v516 = vpack.c.b16 %v509, %v508
        %v517 = vpack.c.b16 %v511, %v510
        %v518 = vpack.c.b16 %v513, %v512
        %vm524 = vcmask 654336
        %v526 = vsel %vm524, %v492, 0
        %v529 = vsel %vm524, %v493, 0
        %531 = vmatprep.subr.bf16.mxu0 0
        %532 = vmatpush1.bf16.msra.mxu0 %v514
        %533 = vmatprep.subr.bf16.mxu0 0
        %534 = vmatpush1.bf16.msra.mxu0 %v515
        %535 = vmatprep.subr.bf16.mxu0 0
        %536 = vmatpush1.bf16.msra.mxu0 %v516
        %537 = vmatprep.subr.bf16.mxu0 0
        %538 = vmatpush1.bf16.msra.mxu0 %v517
        %539 = vmatprep.subr.bf16.mxu0 0
        %540 = vmatpush1.bf16.msra.mxu0 %v518
        %541 = vmatprep.subr.bf16.mxu0 0
        %542 = vmatpush1.bf16.msra.mxu0 0
        %543 = vmatprep.subr.bf16.mxu0 0
        %544 = vmatpush1.bf16.msra.mxu0 0
        %545 = vmatprep.subr.bf16.mxu0 0
        %546 = vmatpush1.bf16.msra.mxu0 0
        %547 = vmatprep.subr.bf16.mxu0 0
        %548 = vmatpush1.bf16.msra.mxu0 0
        %549 = vmatprep.subr.bf16.mxu0 0
        %550 = vmatpush1.bf16.msra.mxu0 0
        %551 = vmatprep.subr.bf16.mxu0 0
        %552 = vmatpush1.bf16.msra.mxu0 0
        %553 = vmatprep.subr.bf16.mxu0 0
        %554 = vmatpush1.bf16.msra.mxu0 0
        %555 = vmatprep.subr.bf16.mxu0 0
        %556 = vmatpush1.bf16.msra.mxu0 0
        %557 = vmatprep.subr.bf16.mxu0 0
        %558 = vmatpush1.bf16.msra.mxu0 0
        %559 = vmatprep.subr.bf16.mxu0 0
        %560 = vmatpush1.bf16.msra.mxu0 0
        %561 = vmatprep.subr.bf16.mxu0 0
        %562 = vmatpush1.bf16.msra.mxu0 0
        %563 = vmatprep.mubr.bf16.mxu0 0
        %564 = vmatmul.mubr.bf16.gmra.mrb[0].mxu0 %v526
        %v565 = vpop.f32.mrb[0].mxu0
        %v566 = vadd.f32 0.0, %v565
        %v567 = vpop.f32.mrb[0].mxu0
        %v568 = vpop.f32.mrb[0].mxu0
        %v569 = vadd.f32 0.0, %v568
        %v570 = vpop.f32.mrb[0].mxu0
        %571 = vmatprep.mubr.bf16.mxu0 0
        %572 = vmatmul.mubr.bf16.gmra.mrb[0].mxu0 %v529
        %v573 = vpop.f32.mrb[0].mxu0
        %v574 = vadd.f32 0.0, %v573
        %v575 = vpop.f32.mrb[0].mxu0
        %v576 = vpop.f32.mrb[0].mxu0
        %v577 = vadd.f32 0.0, %v576
        %v578 = vpop.f32.mrb[0].mxu0
        %579 = vdwg.mxu0
        %v584 = vunpack.c.l.b16 %v330
        %v585 = vunpack.c.l.b16 %v332
        %v586 = vunpack.c.l.b16 %v334
        %v587 = vunpack.c.l.b16 %v336
        %v588 = vpack.c.b16 %v585, %v584
        %v589 = vpack.c.b16 %v587, %v586
        %v600 = vunpack.c.l.b16 %v352
        %v601 = vunpack.c.l.b16 %v353
        %v602 = vunpack.c.l.b16 %v354
        %v603 = vunpack.c.l.b16 %v355
        %v604 = vunpack.c.l.b16 %v356
        %v605 = vunpack.c.l.b16 %v357
        %v606 = vunpack.c.l.b16 %v358
        %v607 = vunpack.c.l.b16 %v359
        %v608 = vunpack.c.l.b16 %v360
        %v609 = vunpack.c.l.b16 %v361
        %v610 = vpack.c.b16 %v601, %v600
        %v611 = vpack.c.b16 %v603, %v602
        %v612 = vpack.c.b16 %v605, %v604
        %v613 = vpack.c.b16 %v607, %v606
        %v614 = vpack.c.b16 %v609, %v608
        %v621 = vsel %vm524, %v588, 0
        %v624 = vsel %vm524, %v589, 0
        %626 = vmatprep.subr.bf16.mxu0 0
        %627 = vmatpush1.bf16.msra.mxu0 %v610
        %628 = vmatprep.subr.bf16.mxu0 0
        %629 = vmatpush1.bf16.msra.mxu0 %v611
        %630 = vmatprep.subr.bf16.mxu0 0
        %631 = vmatpush1.bf16.msra.mxu0 %v612
        %632 = vmatprep.subr.bf16.mxu0 0
        %633 = vmatpush1.bf16.msra.mxu0 %v613
        %634 = vmatprep.subr.bf16.mxu0 0
        %635 = vmatpush1.bf16.msra.mxu0 %v614
        %636 = vmatprep.subr.bf16.mxu0 0
        %637 = vmatpush1.bf16.msra.mxu0 0
        %638 = vmatprep.subr.bf16.mxu0 0
        %639 = vmatpush1.bf16.msra.mxu0 0
        %640 = vmatprep.subr.bf16.mxu0 0
        %641 = vmatpush1.bf16.msra.mxu0 0
        %642 = vmatprep.subr.bf16.mxu0 0
        %643 = vmatpush1.bf16.msra.mxu0 0
        %644 = vmatprep.subr.bf16.mxu0 0
        %645 = vmatpush1.bf16.msra.mxu0 0
        %646 = vmatprep.subr.bf16.mxu0 0
        %647 = vmatpush1.bf16.msra.mxu0 0
        %648 = vmatprep.subr.bf16.mxu0 0
        %649 = vmatpush1.bf16.msra.mxu0 0
        %650 = vmatprep.subr.bf16.mxu0 0
        %651 = vmatpush1.bf16.msra.mxu0 0
        %652 = vmatprep.subr.bf16.mxu0 0
        %653 = vmatpush1.bf16.msra.mxu0 0
        %654 = vmatprep.subr.bf16.mxu0 0
        %655 = vmatpush1.bf16.msra.mxu0 0
        %656 = vmatprep.subr.bf16.mxu0 0
        %657 = vmatpush1.bf16.msra.mxu0 0
        %658 = vmatprep.mubr.bf16.mxu0 0
        %659 = vmatmul.mubr.bf16.gmra.mrb[0].mxu0 %v621
        %v660 = vpop.f32.mrb[0].mxu0
        %v661 = vadd.f32 %v566, %v660
        %v662 = vpop.f32.mrb[0].mxu0
        %v663 = vpop.f32.mrb[0].mxu0
        %v664 = vadd.f32 %v569, %v663
        %v665 = vpop.f32.mrb[0].mxu0
        %666 = vmatprep.mubr.bf16.mxu0 0
        %667 = vmatmul.mubr.bf16.gmra.mrb[0].mxu0 %v624
        %v668 = vpop.f32.mrb[0].mxu0
        %v669 = vadd.f32 %v574, %v668
        %v670 = vpop.f32.mrb[0].mxu0
        %v671 = vpop.f32.mrb[0].mxu0
        %v672 = vadd.f32 %v577, %v671
        %v673 = vpop.f32.mrb[0].mxu0
        %674 = vdwg.mxu0
        %v675 = vunpack.c.l.b16 %v434
        %v676 = vunpack.c.l.b16 %v448
        %v677 = vunpack.c.l.b16 %v462
        %v678 = vunpack.c.l.b16 %v476
        %v679 = vpack.c.b16 %v676, %v675
        %v680 = vpack.c.b16 %v678, %v677
        %v691 = vunpack.c.l.b16 %v342
        %v692 = vunpack.c.l.b16 %v343
        %v693 = vunpack.c.l.b16 %v344
        %v694 = vunpack.c.l.b16 %v345
        %v695 = vunpack.c.l.b16 %v346
        %v696 = vunpack.c.l.b16 %v347
        %v697 = vunpack.c.l.b16 %v348
        %v698 = vunpack.c.l.b16 %v349
        %v699 = vunpack.c.l.b16 %v350
        %v700 = vunpack.c.l.b16 %v351
        %v701 = vpack.c.b16 %v692, %v691
        %v702 = vpack.c.b16 %v694, %v693
        %v703 = vpack.c.b16 %v696, %v695
        %v704 = vpack.c.b16 %v698, %v697
        %v705 = vpack.c.b16 %v700, %v699
        %v712 = vsel %vm524, %v679, 0
        %v715 = vsel %vm524, %v680, 0
        %717 = vmatprep.subr.bf16.mxu0 0
        %718 = vmatpush1.bf16.msra.mxu0 %v701
        %719 = vmatprep.subr.bf16.mxu0 0
        %720 = vmatpush1.bf16.msra.mxu0 %v702
        %721 = vmatprep.subr.bf16.mxu0 0
        %722 = vmatpush1.bf16.msra.mxu0 %v703
        %723 = vmatprep.subr.bf16.mxu0 0
        %724 = vmatpush1.bf16.msra.mxu0 %v704
        %725 = vmatprep.subr.bf16.mxu0 0
        %726 = vmatpush1.bf16.msra.mxu0 %v705
        %727 = vmatprep.subr.bf16.mxu0 0
        %728 = vmatpush1.bf16.msra.mxu0 0
        %729 = vmatprep.subr.bf16.mxu0 0
        %730 = vmatpush1.bf16.msra.mxu0 0
        %731 = vmatprep.subr.bf16.mxu0 0
        %732 = vmatpush1.bf16.msra.mxu0 0
        %733 = vmatprep.subr.bf16.mxu0 0
        %734 = vmatpush1.bf16.msra.mxu0 0
        %735 = vmatprep.subr.bf16.mxu0 0
        %736 = vmatpush1.bf16.msra.mxu0 0
        %737 = vmatprep.subr.bf16.mxu0 0
        %738 = vmatpush1.bf16.msra.mxu0 0
        %739 = vmatprep.subr.bf16.mxu0 0
        %740 = vmatpush1.bf16.msra.mxu0 0
        %741 = vmatprep.subr.bf16.mxu0 0
        %742 = vmatpush1.bf16.msra.mxu0 0
        %743 = vmatprep.subr.bf16.mxu0 0
        %744 = vmatpush1.bf16.msra.mxu0 0
        %745 = vmatprep.subr.bf16.mxu0 0
        %746 = vmatpush1.bf16.msra.mxu0 0
        %747 = vmatprep.subr.bf16.mxu0 0
        %748 = vmatpush1.bf16.msra.mxu0 0
        %749 = vmatprep.mubr.bf16.mxu0 0
        %750 = vmatmul.mubr.bf16.gmra.mrb[0].mxu0 %v712
        %v751 = vpop.f32.mrb[0].mxu0
        %v752 = vadd.f32 0.0, %v751
        %v753 = vpop.f32.mrb[0].mxu0
        %v754 = vpop.f32.mrb[0].mxu0
        %v755 = vadd.f32 0.0, %v754
        %v756 = vpop.f32.mrb[0].mxu0
        %757 = vmatprep.mubr.bf16.mxu0 0
        %758 = vmatmul.mubr.bf16.gmra.mrb[0].mxu0 %v715
        %v759 = vpop.f32.mrb[0].mxu0
        %v760 = vadd.f32 0.0, %v759
        %v761 = vpop.f32.mrb[0].mxu0
        %v762 = vpop.f32.mrb[0].mxu0
        %v763 = vadd.f32 0.0, %v762
        %v764 = vpop.f32.mrb[0].mxu0
        %765 = vdwg.mxu0
        %v770 = vunpack.c.l.b16 %v318
        %v771 = vunpack.c.l.b16 %v320
        %v772 = vunpack.c.l.b16 %v322
        %v773 = vunpack.c.l.b16 %v324
        %v774 = vpack.c.b16 %v771, %v770
        %v775 = vpack.c.b16 %v773, %v772
        %v777 = vsel %vm524, %v774, 0
        %v780 = vsel %vm524, %v775, 0
        %782 = vmatprep.subr.bf16.mxu0 0
        %783 = vmatpush1.bf16.msra.mxu0 %v701
        %784 = vmatprep.subr.bf16.mxu0 0
        %785 = vmatpush1.bf16.msra.mxu0 %v702
        %786 = vmatprep.subr.bf16.mxu0 0
        %787 = vmatpush1.bf16.msra.mxu0 %v703
        %788 = vmatprep.subr.bf16.mxu0 0
        %789 = vmatpush1.bf16.msra.mxu0 %v704
        %790 = vmatprep.subr.bf16.mxu0 0
        %791 = vmatpush1.bf16.msra.mxu0 %v705
        %792 = vmatprep.subr.bf16.mxu0 0
        %793 = vmatpush1.bf16.msra.mxu0 0
        %794 = vmatprep.subr.bf16.mxu0 0
        %795 = vmatpush1.bf16.msra.mxu0 0
        %796 = vmatprep.subr.bf16.mxu0 0
        %797 = vmatpush1.bf16.msra.mxu0 0
        %798 = vmatprep.subr.bf16.mxu0 0
        %799 = vmatpush1.bf16.msra.mxu0 0
        %800 = vmatprep.subr.bf16.mxu0 0
        %801 = vmatpush1.bf16.msra.mxu0 0
        %802 = vmatprep.subr.bf16.mxu0 0
        %803 = vmatpush1.bf16.msra.mxu0 0
        %804 = vmatprep.subr.bf16.mxu0 0
        %805 = vmatpush1.bf16.msra.mxu0 0
        %806 = vmatprep.subr.bf16.mxu0 0
        %807 = vmatpush1.bf16.msra.mxu0 0
        %808 = vmatprep.subr.bf16.mxu0 0
        %809 = vmatpush1.bf16.msra.mxu0 0
        %810 = vmatprep.subr.bf16.mxu0 0
        %811 = vmatpush1.bf16.msra.mxu0 0
        %812 = vmatprep.subr.bf16.mxu0 0
        %813 = vmatpush1.bf16.msra.mxu0 0
        %814 = vmatprep.mubr.bf16.mxu0 0
        %815 = vmatmul.mubr.bf16.gmra.mrb[0].mxu0 %v777
        %v816 = vpop.f32.mrb[0].mxu0
        %v817 = vadd.f32 %v752, %v816
        %v818 = vpop.f32.mrb[0].mxu0
        %v819 = vpop.f32.mrb[0].mxu0
        %v820 = vadd.f32 %v755, %v819
        %v821 = vpop.f32.mrb[0].mxu0
        %822 = vmatprep.mubr.bf16.mxu0 0
        %823 = vmatmul.mubr.bf16.gmra.mrb[0].mxu0 %v780
        %v824 = vpop.f32.mrb[0].mxu0
        %v825 = vadd.f32 %v760, %v824
        %v826 = vpop.f32.mrb[0].mxu0
        %v827 = vpop.f32.mrb[0].mxu0
        %v828 = vadd.f32 %v763, %v827
        %v829 = vpop.f32.mrb[0].mxu0
        %830 = vdwg.mxu0
        %vm835 = vcmask 1042432
        %vm836 = vcmask 1046532
        %vm837 = vmor %vm835, %vm836
        %v838 = vrot.slane %v330, 5
        %v839 = vrot.slane %v838, 4
        %v840 = vrot.slane %v331, 5
        %v841 = vsel %vm837, %v839, %v840
        %v842 = vrot.slane %v332, 5
        %v843 = vrot.slane %v842, 4
        %v844 = vrot.slane %v333, 5
        %v845 = vsel %vm837, %v843, %v844
        %v846 = vrot.slane %v334, 5
        %v847 = vrot.slane %v846, 4
        %v848 = vrot.slane %v335, 5
        %v849 = vsel %vm837, %v847, %v848
        %v850 = vrot.slane %v336, 5
        %v851 = vrot.slane %v850, 4
        %v852 = vrot.slane %v337, 5
        %v853 = vsel %vm837, %v851, %v852
        %v858 = vrot.slane %v318, 5
        %v859 = vrot.slane %v858, 4
        %v860 = vrot.slane %v319, 5
        %v861 = vsel %vm837, %v859, %v860
        %v862 = vrot.slane %v320, 5
        %v863 = vrot.slane %v862, 4
        %v864 = vrot.slane %v321, 5
        %v865 = vsel %vm837, %v863, %v864
        %v866 = vrot.slane %v322, 5
        %v867 = vrot.slane %v866, 4
        %v868 = vrot.slane %v323, 5
        %v869 = vsel %vm837, %v867, %v868
        %v870 = vrot.slane %v324, 5
        %v871 = vrot.slane %v870, 4
        %v872 = vrot.slane %v325, 5
        %v873 = vsel %vm837, %v871, %v872
        %s874 = scalar_lea.vmem %s2, 80
        %v875 = vld [vmem:[%s874] sm:$0xf]
        %v876 = vld [vmem:[%s874 + $0x4] sm:$0xf]
        %v877 = vld [vmem:[%s874 + $0x8] sm:$0xf]
        %v878 = vld [vmem:[%s874 + $0xc] sm:$0xf]
        %v879 = vld [vmem:[%s874 + $0x10] sm:$0xf]
        %v880 = vld [vmem:[%s874 + $0x14] sm:$0xf]
        %v881 = vld [vmem:[%s874 + $0x18] sm:$0xf]
        %v882 = vld [vmem:[%s874 + $0x1c] sm:$0xf]
        %v883 = vld [vmem:[%s874 + $0x20] sm:$0xf]
        %v884 = vld [vmem:[%s874 + $0x24] sm:$0xf]
        %v885 = vunpack.c.l.b16 %v841
        %v886 = vunpack.c.l.b16 %v845
        %v887 = vunpack.c.l.b16 %v849
        %v888 = vunpack.c.l.b16 %v853
        %v889 = vpack.c.b16 %v886, %v885
        %v890 = vpack.c.b16 %v888, %v887
        %v901 = vunpack.c.l.b16 %v875
        %v902 = vunpack.c.l.b16 %v876
        %v903 = vunpack.c.l.b16 %v877
        %v904 = vunpack.c.l.b16 %v878
        %v905 = vunpack.c.l.b16 %v879
        %v906 = vunpack.c.l.b16 %v880
        %v907 = vunpack.c.l.b16 %v881
        %v908 = vunpack.c.l.b16 %v882
        %v909 = vunpack.c.l.b16 %v883
        %v910 = vunpack.c.l.b16 %v884
        %v911 = vpack.c.b16 %v902, %v901
        %v912 = vpack.c.b16 %v904, %v903
        %v913 = vpack.c.b16 %v906, %v905
        %v914 = vpack.c.b16 %v908, %v907
        %v915 = vpack.c.b16 %v910, %v909
        %v922 = vsel %vm524, %v889, 0
        %v925 = vsel %vm524, %v890, 0
        %927 = vmatprep.subr.bf16.mxu0 0
        %928 = vmatpush1.bf16.msra.mxu0 %v911
        %929 = vmatprep.subr.bf16.mxu0 0
        %930 = vmatpush1.bf16.msra.mxu0 %v912
        %931 = vmatprep.subr.bf16.mxu0 0
        %932 = vmatpush1.bf16.msra.mxu0 %v913
        %933 = vmatprep.subr.bf16.mxu0 0
        %934 = vmatpush1.bf16.msra.mxu0 %v914
        %935 = vmatprep.subr.bf16.mxu0 0
        %936 = vmatpush1.bf16.msra.mxu0 %v915
        %937 = vmatprep.subr.bf16.mxu0 0
        %938 = vmatpush1.bf16.msra.mxu0 0
        %939 = vmatprep.subr.bf16.mxu0 0
        %940 = vmatpush1.bf16.msra.mxu0 0
        %941 = vmatprep.subr.bf16.mxu0 0
        %942 = vmatpush1.bf16.msra.mxu0 0
        %943 = vmatprep.subr.bf16.mxu0 0
        %944 = vmatpush1.bf16.msra.mxu0 0
        %945 = vmatprep.subr.bf16.mxu0 0
        %946 = vmatpush1.bf16.msra.mxu0 0
        %947 = vmatprep.subr.bf16.mxu0 0
        %948 = vmatpush1.bf16.msra.mxu0 0
        %949 = vmatprep.subr.bf16.mxu0 0
        %950 = vmatpush1.bf16.msra.mxu0 0
        %951 = vmatprep.subr.bf16.mxu0 0
        %952 = vmatpush1.bf16.msra.mxu0 0
        %953 = vmatprep.subr.bf16.mxu0 0
        %954 = vmatpush1.bf16.msra.mxu0 0
        %955 = vmatprep.subr.bf16.mxu0 0
        %956 = vmatpush1.bf16.msra.mxu0 0
        %957 = vmatprep.subr.bf16.mxu0 0
        %958 = vmatpush1.bf16.msra.mxu0 0
        %959 = vmatprep.mubr.bf16.mxu0 0
        %960 = vmatmul.mubr.bf16.gmra.mrb[0].mxu0 %v922
        %v961 = vpop.f32.mrb[0].mxu0
        %v962 = vadd.f32 0.0, %v961
        %v963 = vpop.f32.mrb[0].mxu0
        %v964 = vpop.f32.mrb[0].mxu0
        %v965 = vadd.f32 0.0, %v964
        %v966 = vpop.f32.mrb[0].mxu0
        %967 = vmatprep.mubr.bf16.mxu0 0
        %968 = vmatmul.mubr.bf16.gmra.mrb[0].mxu0 %v925
        %v969 = vpop.f32.mrb[0].mxu0
        %v970 = vadd.f32 0.0, %v969
        %v971 = vpop.f32.mrb[0].mxu0
        %v972 = vpop.f32.mrb[0].mxu0
        %v973 = vadd.f32 0.0, %v972
        %v974 = vpop.f32.mrb[0].mxu0
        %975 = vdwg.mxu0
        %v976 = vadd.f32 %v661, %v962
        %v977 = vadd.f32 %v664, %v965
        %v978 = vadd.f32 %v669, %v970
        %v979 = vadd.f32 %v672, %v973
        %v980 = vunpack.c.l.b16 %v861
        %v981 = vunpack.c.l.b16 %v865
        %v982 = vunpack.c.l.b16 %v869
        %v983 = vunpack.c.l.b16 %v873
        %v984 = vpack.c.b16 %v981, %v980
        %v985 = vpack.c.b16 %v983, %v982
        %v987 = vsel %vm524, %v984, 0
        %v990 = vsel %vm524, %v985, 0
        %992 = vmatprep.subr.bf16.mxu0 0
        %993 = vmatpush1.bf16.msra.mxu0 %v701
        %994 = vmatprep.subr.bf16.mxu0 0
        %995 = vmatpush1.bf16.msra.mxu0 %v702
        %996 = vmatprep.subr.bf16.mxu0 0
        %997 = vmatpush1.bf16.msra.mxu0 %v703
        %998 = vmatprep.subr.bf16.mxu0 0
        %999 = vmatpush1.bf16.msra.mxu0 %v704
        %1000 = vmatprep.subr.bf16.mxu0 0
        %1001 = vmatpush1.bf16.msra.mxu0 %v705
        %1002 = vmatprep.subr.bf16.mxu0 0
        %1003 = vmatpush1.bf16.msra.mxu0 0
        %1004 = vmatprep.subr.bf16.mxu0 0
        %1005 = vmatpush1.bf16.msra.mxu0 0
        %1006 = vmatprep.subr.bf16.mxu0 0
        %1007 = vmatpush1.bf16.msra.mxu0 0
        %1008 = vmatprep.subr.bf16.mxu0 0
        %1009 = vmatpush1.bf16.msra.mxu0 0
        %1010 = vmatprep.subr.bf16.mxu0 0
        %1011 = vmatpush1.bf16.msra.mxu0 0
        %1012 = vmatprep.subr.bf16.mxu0 0
        %1013 = vmatpush1.bf16.msra.mxu0 0
        %1014 = vmatprep.subr.bf16.mxu0 0
        %1015 = vmatpush1.bf16.msra.mxu0 0
        %1016 = vmatprep.subr.bf16.mxu0 0
        %1017 = vmatpush1.bf16.msra.mxu0 0
        %1018 = vmatprep.subr.bf16.mxu0 0
        %1019 = vmatpush1.bf16.msra.mxu0 0
        %1020 = vmatprep.subr.bf16.mxu0 0
        %1021 = vmatpush1.bf16.msra.mxu0 0
        %1022 = vmatprep.subr.bf16.mxu0 0
        %1023 = vmatpush1.bf16.msra.mxu0 0
        %1024 = vmatprep.mubr.bf16.mxu0 0
        %1025 = vmatmul.mubr.bf16.gmra.mrb[0].mxu0 %v987
        %v1026 = vpop.f32.mrb[0].mxu0
        %v1027 = vadd.f32 0.0, %v1026
        %v1028 = vpop.f32.mrb[0].mxu0
        %v1029 = vpop.f32.mrb[0].mxu0
        %v1030 = vadd.f32 0.0, %v1029
        %v1031 = vpop.f32.mrb[0].mxu0
        %1032 = vmatprep.mubr.bf16.mxu0 0
        %1033 = vmatmul.mubr.bf16.gmra.mrb[0].mxu0 %v990
        %v1034 = vpop.f32.mrb[0].mxu0
        %v1035 = vadd.f32 0.0, %v1034
        %v1036 = vpop.f32.mrb[0].mxu0
        %v1037 = vpop.f32.mrb[0].mxu0
        %v1038 = vadd.f32 0.0, %v1037
        %v1039 = vpop.f32.mrb[0].mxu0
        %1040 = vdwg.mxu0
        %v1041 = vadd.f32 %v817, %v1027
        %v1042 = vadd.f32 %v820, %v1030
        %v1043 = vadd.f32 %v825, %v1035
        %v1044 = vadd.f32 %v828, %v1038
        %s1045 = scalar_lea.vmem %s2, 120
        %v1046 = vld [vmem:[%s1045] sm:$0xf]
        %v1047 = vld [vmem:[%s1045 + $0x4] sm:$0xf]
        %v1048 = vld [vmem:[%s1045 + $0x8] sm:$0xf]
        %v1049 = vld [vmem:[%s1045 + $0xc] sm:$0xf]
        %v1050 = vld [vmem:[%s1045 + $0x10] sm:$0xf]
        %v1051 = vld [vmem:[%s1045 + $0x14] sm:$0xf]
        %v1052 = vld [vmem:[%s1045 + $0x18] sm:$0xf]
        %v1053 = vld [vmem:[%s1045 + $0x1c] sm:$0xf]
        %v1054 = vld [vmem:[%s1045 + $0x20] sm:$0xf]
        %v1055 = vld [vmem:[%s1045 + $0x24] sm:$0xf]
        %v1057 = vunpack.c.l.b16 %v338
        %v1058 = vpack.c.b16 %v586, %v585
        %v1059 = vpack.c.b16 %v1057, %v587
        %v1070 = vunpack.c.l.b16 %v1046
        %v1071 = vunpack.c.l.b16 %v1047
        %v1072 = vunpack.c.l.b16 %v1048
        %v1073 = vunpack.c.l.b16 %v1049
        %v1074 = vunpack.c.l.b16 %v1050
        %v1075 = vunpack.c.l.b16 %v1051
        %v1076 = vunpack.c.l.b16 %v1052
        %v1077 = vunpack.c.l.b16 %v1053
        %v1078 = vunpack.c.l.b16 %v1054
        %v1079 = vunpack.c.l.b16 %v1055
        %v1080 = vpack.c.b16 %v1071, %v1070
        %v1081 = vpack.c.b16 %v1073, %v1072
        %v1082 = vpack.c.b16 %v1075, %v1074
        %v1083 = vpack.c.b16 %v1077, %v1076
        %v1084 = vpack.c.b16 %v1079, %v1078
        %v1091 = vsel %vm524, %v1058, 0
        %v1094 = vsel %vm524, %v1059, 0
        %1096 = vmatprep.subr.bf16.mxu0 0
        %1097 = vmatpush1.bf16.msra.mxu0 %v1080
        %1098 = vmatprep.subr.bf16.mxu0 0
        %1099 = vmatpush1.bf16.msra.mxu0 %v1081
        %1100 = vmatprep.subr.bf16.mxu0 0
        %1101 = vmatpush1.bf16.msra.mxu0 %v1082
        %1102 = vmatprep.subr.bf16.mxu0 0
        %1103 = vmatpush1.bf16.msra.mxu0 %v1083
        %1104 = vmatprep.subr.bf16.mxu0 0
        %1105 = vmatpush1.bf16.msra.mxu0 %v1084
        %1106 = vmatprep.subr.bf16.mxu0 0
        %1107 = vmatpush1.bf16.msra.mxu0 0
        %1108 = vmatprep.subr.bf16.mxu0 0
        %1109 = vmatpush1.bf16.msra.mxu0 0
        %1110 = vmatprep.subr.bf16.mxu0 0
        %1111 = vmatpush1.bf16.msra.mxu0 0
        %1112 = vmatprep.subr.bf16.mxu0 0
        %1113 = vmatpush1.bf16.msra.mxu0 0
        %1114 = vmatprep.subr.bf16.mxu0 0
        %1115 = vmatpush1.bf16.msra.mxu0 0
        %1116 = vmatprep.subr.bf16.mxu0 0
        %1117 = vmatpush1.bf16.msra.mxu0 0
        %1118 = vmatprep.subr.bf16.mxu0 0
        %1119 = vmatpush1.bf16.msra.mxu0 0
        %1120 = vmatprep.subr.bf16.mxu0 0
        %1121 = vmatpush1.bf16.msra.mxu0 0
        %1122 = vmatprep.subr.bf16.mxu0 0
        %1123 = vmatpush1.bf16.msra.mxu0 0
        %1124 = vmatprep.subr.bf16.mxu0 0
        %1125 = vmatpush1.bf16.msra.mxu0 0
        %1126 = vmatprep.subr.bf16.mxu0 0
        %1127 = vmatpush1.bf16.msra.mxu0 0
        %1128 = vmatprep.mubr.bf16.mxu0 0
        %1129 = vmatmul.mubr.bf16.gmra.mrb[0].mxu0 %v1091
        %v1130 = vpop.f32.mrb[0].mxu0
        %v1131 = vadd.f32 0.0, %v1130
        %v1132 = vpop.f32.mrb[0].mxu0
        %v1133 = vpop.f32.mrb[0].mxu0
        %v1134 = vadd.f32 0.0, %v1133
        %v1135 = vpop.f32.mrb[0].mxu0
        %1136 = vmatprep.mubr.bf16.mxu0 0
        %1137 = vmatmul.mubr.bf16.gmra.mrb[0].mxu0 %v1094
        %v1138 = vpop.f32.mrb[0].mxu0
        %v1139 = vadd.f32 0.0, %v1138
        %v1140 = vpop.f32.mrb[0].mxu0
        %v1141 = vpop.f32.mrb[0].mxu0
        %v1142 = vadd.f32 0.0, %v1141
        %v1143 = vpop.f32.mrb[0].mxu0
        %1144 = vdwg.mxu0
        %v1145 = vadd.f32 %v976, %v1131
        %v1146 = vadd.f32 %v977, %v1134
        %v1147 = vadd.f32 %v978, %v1139
        %v1148 = vadd.f32 %v979, %v1142
        %v1150 = vunpack.c.l.b16 %v326
        %v1151 = vpack.c.b16 %v772, %v771
        %v1152 = vpack.c.b16 %v1150, %v773
        %v1154 = vsel %vm524, %v1151, 0
        %v1157 = vsel %vm524, %v1152, 0
        %1159 = vmatprep.subr.bf16.mxu0 0
        %1160 = vmatpush1.bf16.msra.mxu0 %v701
        %1161 = vmatprep.subr.bf16.mxu0 0
        %1162 = vmatpush1.bf16.msra.mxu0 %v702
        %1163 = vmatprep.subr.bf16.mxu0 0
        %1164 = vmatpush1.bf16.msra.mxu0 %v703
        %1165 = vmatprep.subr.bf16.mxu0 0
        %1166 = vmatpush1.bf16.msra.mxu0 %v704
        %1167 = vmatprep.subr.bf16.mxu0 0
        %1168 = vmatpush1.bf16.msra.mxu0 %v705
        %1169 = vmatprep.subr.bf16.mxu0 0
        %1170 = vmatpush1.bf16.msra.mxu0 0
        %1171 = vmatprep.subr.bf16.mxu0 0
        %1172 = vmatpush1.bf16.msra.mxu0 0
        %1173 = vmatprep.subr.bf16.mxu0 0
        %1174 = vmatpush1.bf16.msra.mxu0 0
        %1175 = vmatprep.subr.bf16.mxu0 0
        %1176 = vmatpush1.bf16.msra.mxu0 0
        %1177 = vmatprep.subr.bf16.mxu0 0
        %1178 = vmatpush1.bf16.msra.mxu0 0
        %1179 = vmatprep.subr.bf16.mxu0 0
        %1180 = vmatpush1.bf16.msra.mxu0 0
        %1181 = vmatprep.subr.bf16.mxu0 0
        %1182 = vmatpush1.bf16.msra.mxu0 0
        %1183 = vmatprep.subr.bf16.mxu0 0
        %1184 = vmatpush1.bf16.msra.mxu0 0
        %1185 = vmatprep.subr.bf16.mxu0 0
        %1186 = vmatpush1.bf16.msra.mxu0 0
        %1187 = vmatprep.subr.bf16.mxu0 0
        %1188 = vmatpush1.bf16.msra.mxu0 0
        %1189 = vmatprep.subr.bf16.mxu0 0
        %1190 = vmatpush1.bf16.msra.mxu0 0
        %1191 = vmatprep.mubr.bf16.mxu0 0
        %1192 = vmatmul.mubr.bf16.gmra.mrb[0].mxu0 %v1154
        %v1193 = vpop.f32.mrb[0].mxu0
        %v1194 = vadd.f32 0.0, %v1193
        %v1195 = vpop.f32.mrb[0].mxu0
        %v1196 = vpop.f32.mrb[0].mxu0
        %v1197 = vadd.f32 0.0, %v1196
        %v1198 = vpop.f32.mrb[0].mxu0
        %1199 = vmatprep.mubr.bf16.mxu0 0
        %1200 = vmatmul.mubr.bf16.gmra.mrb[0].mxu0 %v1157
        %v1201 = vpop.f32.mrb[0].mxu0
        %v1202 = vadd.f32 0.0, %v1201
        %v1203 = vpop.f32.mrb[0].mxu0
        %v1204 = vpop.f32.mrb[0].mxu0
        %v1205 = vadd.f32 0.0, %v1204
        %v1206 = vpop.f32.mrb[0].mxu0
        %1207 = vdwg.mxu0
        %v1208 = vadd.f32 %v1041, %v1194
        %v1209 = vadd.f32 %v1042, %v1197
        %v1210 = vadd.f32 %v1043, %v1202
        %v1211 = vadd.f32 %v1044, %v1205
        %v1213 = vshrl.u32 %v338, 16
        %v1215 = vrot.slane %v1213, 4
        %v1216 = vshll.u32 %v338, 16
        %v1218 = vrot.slane %v1216, 5
        %v1219 = vor.u32 %v1215, %v1218
        %v1220 = vrot.slane %v1219, 4
        %v1222 = vshll.u32 %v339, 16
        %v1224 = vrot.slane %v1222, 5
        %v1225 = vsel %vm364, %v1220, %v1224
        %v1227 = vshrl.u32 %v326, 16
        %v1229 = vrot.slane %v1227, 4
        %v1230 = vshll.u32 %v326, 16
        %v1232 = vrot.slane %v1230, 5
        %v1233 = vor.u32 %v1229, %v1232
        %v1234 = vrot.slane %v1233, 4
        %v1236 = vshll.u32 %v327, 16
        %v1238 = vrot.slane %v1236, 5
        %v1239 = vsel %vm364, %v1234, %v1238
        %s1240 = scalar_lea.vmem %s2, 160
        %v1241 = vld [vmem:[%s1240] sm:$0xf]
        %v1242 = vld [vmem:[%s1240 + $0x4] sm:$0xf]
        %v1243 = vld [vmem:[%s1240 + $0x8] sm:$0xf]
        %v1244 = vld [vmem:[%s1240 + $0xc] sm:$0xf]
        %v1245 = vld [vmem:[%s1240 + $0x10] sm:$0xf]
        %v1246 = vld [vmem:[%s1240 + $0x14] sm:$0xf]
        %v1247 = vld [vmem:[%s1240 + $0x18] sm:$0xf]
        %v1248 = vld [vmem:[%s1240 + $0x1c] sm:$0xf]
        %v1249 = vld [vmem:[%s1240 + $0x20] sm:$0xf]
        %v1250 = vld [vmem:[%s1240 + $0x24] sm:$0xf]
        %v1251 = vunpack.c.l.b16 %v1225
        %v1252 = vpack.c.b16 %v490, %v489
        %v1253 = vpack.c.b16 %v1251, %v491
        %v1264 = vunpack.c.l.b16 %v1241
        %v1265 = vunpack.c.l.b16 %v1242
        %v1266 = vunpack.c.l.b16 %v1243
        %v1267 = vunpack.c.l.b16 %v1244
        %v1268 = vunpack.c.l.b16 %v1245
        %v1269 = vunpack.c.l.b16 %v1246
        %v1270 = vunpack.c.l.b16 %v1247
        %v1271 = vunpack.c.l.b16 %v1248
        %v1272 = vunpack.c.l.b16 %v1249
        %v1273 = vunpack.c.l.b16 %v1250
        %v1274 = vpack.c.b16 %v1265, %v1264
        %v1275 = vpack.c.b16 %v1267, %v1266
        %v1276 = vpack.c.b16 %v1269, %v1268
        %v1277 = vpack.c.b16 %v1271, %v1270
        %v1278 = vpack.c.b16 %v1273, %v1272
        %v1285 = vsel %vm524, %v1252, 0
        %v1288 = vsel %vm524, %v1253, 0
        %1290 = vmatprep.subr.bf16.mxu0 0
        %1291 = vmatpush1.bf16.msra.mxu0 %v1274
        %1292 = vmatprep.subr.bf16.mxu0 0
        %1293 = vmatpush1.bf16.msra.mxu0 %v1275
        %1294 = vmatprep.subr.bf16.mxu0 0
        %1295 = vmatpush1.bf16.msra.mxu0 %v1276
        %1296 = vmatprep.subr.bf16.mxu0 0
        %1297 = vmatpush1.bf16.msra.mxu0 %v1277
        %1298 = vmatprep.subr.bf16.mxu0 0
        %1299 = vmatpush1.bf16.msra.mxu0 %v1278
        %1300 = vmatprep.subr.bf16.mxu0 0
        %1301 = vmatpush1.bf16.msra.mxu0 0
        %1302 = vmatprep.subr.bf16.mxu0 0
        %1303 = vmatpush1.bf16.msra.mxu0 0
        %1304 = vmatprep.subr.bf16.mxu0 0
        %1305 = vmatpush1.bf16.msra.mxu0 0
        %1306 = vmatprep.subr.bf16.mxu0 0
        %1307 = vmatpush1.bf16.msra.mxu0 0
        %1308 = vmatprep.subr.bf16.mxu0 0
        %1309 = vmatpush1.bf16.msra.mxu0 0
        %1310 = vmatprep.subr.bf16.mxu0 0
        %1311 = vmatpush1.bf16.msra.mxu0 0
        %1312 = vmatprep.subr.bf16.mxu0 0
        %1313 = vmatpush1.bf16.msra.mxu0 0
        %1314 = vmatprep.subr.bf16.mxu0 0
        %1315 = vmatpush1.bf16.msra.mxu0 0
        %1316 = vmatprep.subr.bf16.mxu0 0
        %1317 = vmatpush1.bf16.msra.mxu0 0
        %1318 = vmatprep.subr.bf16.mxu0 0
        %1319 = vmatpush1.bf16.msra.mxu0 0
        %1320 = vmatprep.subr.bf16.mxu0 0
        %1321 = vmatpush1.bf16.msra.mxu0 0
        %1322 = vmatprep.mubr.bf16.mxu0 0
        %1323 = vmatmul.mubr.bf16.gmra.mrb[0].mxu0 %v1285
        %v1324 = vpop.f32.mrb[0].mxu0
        %v1325 = vadd.f32 0.0, %v1324
        %v1326 = vpop.f32.mrb[0].mxu0
        %v1327 = vpop.f32.mrb[0].mxu0
        %v1328 = vadd.f32 0.0, %v1327
        %v1329 = vpop.f32.mrb[0].mxu0
        %1330 = vmatprep.mubr.bf16.mxu0 0
        %1331 = vmatmul.mubr.bf16.gmra.mrb[0].mxu0 %v1288
        %v1332 = vpop.f32.mrb[0].mxu0
        %v1333 = vadd.f32 0.0, %v1332
        %v1334 = vpop.f32.mrb[0].mxu0
        %v1335 = vpop.f32.mrb[0].mxu0
        %v1336 = vadd.f32 0.0, %v1335
        %v1337 = vpop.f32.mrb[0].mxu0
        %1338 = vdwg.mxu0
        %v1339 = vadd.f32 %v1145, %v1325
        %v1340 = vadd.f32 %v1146, %v1328
        %v1341 = vadd.f32 %v1147, %v1333
        %v1342 = vadd.f32 %v1148, %v1336
        %v1343 = vunpack.c.l.b16 %v1239
        %v1344 = vpack.c.b16 %v677, %v676
        %v1345 = vpack.c.b16 %v1343, %v678
        %v1347 = vsel %vm524, %v1344, 0
        %v1350 = vsel %vm524, %v1345, 0
        %1352 = vmatprep.subr.bf16.mxu0 0
        %1353 = vmatpush1.bf16.msra.mxu0 %v701
        %1354 = vmatprep.subr.bf16.mxu0 0
        %1355 = vmatpush1.bf16.msra.mxu0 %v702
        %1356 = vmatprep.subr.bf16.mxu0 0
        %1357 = vmatpush1.bf16.msra.mxu0 %v703
        %1358 = vmatprep.subr.bf16.mxu0 0
        %1359 = vmatpush1.bf16.msra.mxu0 %v704
        %1360 = vmatprep.subr.bf16.mxu0 0
        %1361 = vmatpush1.bf16.msra.mxu0 %v705
        %1362 = vmatprep.subr.bf16.mxu0 0
        %1363 = vmatpush1.bf16.msra.mxu0 0
        %1364 = vmatprep.subr.bf16.mxu0 0
        %1365 = vmatpush1.bf16.msra.mxu0 0
        %1366 = vmatprep.subr.bf16.mxu0 0
        %1367 = vmatpush1.bf16.msra.mxu0 0
        %1368 = vmatprep.subr.bf16.mxu0 0
        %1369 = vmatpush1.bf16.msra.mxu0 0
        %1370 = vmatprep.subr.bf16.mxu0 0
        %1371 = vmatpush1.bf16.msra.mxu0 0
        %1372 = vmatprep.subr.bf16.mxu0 0
        %1373 = vmatpush1.bf16.msra.mxu0 0
        %1374 = vmatprep.subr.bf16.mxu0 0
        %1375 = vmatpush1.bf16.msra.mxu0 0
        %1376 = vmatprep.subr.bf16.mxu0 0
        %1377 = vmatpush1.bf16.msra.mxu0 0
        %1378 = vmatprep.subr.bf16.mxu0 0
        %1379 = vmatpush1.bf16.msra.mxu0 0
        %1380 = vmatprep.subr.bf16.mxu0 0
        %1381 = vmatpush1.bf16.msra.mxu0 0
        %1382 = vmatprep.subr.bf16.mxu0 0
        %1383 = vmatpush1.bf16.msra.mxu0 0
        %1384 = vmatprep.mubr.bf16.mxu0 0
        %1385 = vmatmul.mubr.bf16.gmra.mrb[0].mxu0 %v1347
        %v1386 = vpop.f32.mrb[0].mxu0
        %v1387 = vadd.f32 0.0, %v1386
        %v1388 = vpop.f32.mrb[0].mxu0
        %v1389 = vpop.f32.mrb[0].mxu0
        %v1390 = vadd.f32 0.0, %v1389
        %v1391 = vpop.f32.mrb[0].mxu0
        %1392 = vmatprep.mubr.bf16.mxu0 0
        %1393 = vmatmul.mubr.bf16.gmra.mrb[0].mxu0 %v1350
        %v1394 = vpop.f32.mrb[0].mxu0
        %v1395 = vadd.f32 0.0, %v1394
        %v1396 = vpop.f32.mrb[0].mxu0
        %v1397 = vpop.f32.mrb[0].mxu0
        %v1398 = vadd.f32 0.0, %v1397
        %v1399 = vpop.f32.mrb[0].mxu0
        %1400 = vdwg.mxu0
        %v1401 = vadd.f32 %v1208, %v1387
        %v1402 = vadd.f32 %v1209, %v1390
        %v1403 = vadd.f32 %v1210, %v1395
        %v1404 = vadd.f32 %v1211, %v1398
        %v1406 = vrot.slane %v338, 5
        %v1407 = vrot.slane %v1406, 4
        %v1408 = vrot.slane %v339, 5
        %v1409 = vsel %vm837, %v1407, %v1408
        %v1411 = vrot.slane %v326, 5
        %v1412 = vrot.slane %v1411, 4
        %v1413 = vrot.slane %v327, 5
        %v1414 = vsel %vm837, %v1412, %v1413
        %s1415 = scalar_lea.vmem %s2, 200
        %v1416 = vld [vmem:[%s1415] sm:$0xf]
        %v1417 = vld [vmem:[%s1415 + $0x4] sm:$0xf]
        %v1418 = vld [vmem:[%s1415 + $0x8] sm:$0xf]
        %v1419 = vld [vmem:[%s1415 + $0xc] sm:$0xf]
        %v1420 = vld [vmem:[%s1415 + $0x10] sm:$0xf]
        %v1421 = vld [vmem:[%s1415 + $0x14] sm:$0xf]
        %v1422 = vld [vmem:[%s1415 + $0x18] sm:$0xf]
        %v1423 = vld [vmem:[%s1415 + $0x1c] sm:$0xf]
        %v1424 = vld [vmem:[%s1415 + $0x20] sm:$0xf]
        %v1425 = vld [vmem:[%s1415 + $0x24] sm:$0xf]
        %v1426 = vunpack.c.l.b16 %v1409
        %v1427 = vpack.c.b16 %v887, %v886
        %v1428 = vpack.c.b16 %v1426, %v888
        %v1439 = vunpack.c.l.b16 %v1416
        %v1440 = vunpack.c.l.b16 %v1417
        %v1441 = vunpack.c.l.b16 %v1418
        %v1442 = vunpack.c.l.b16 %v1419
        %v1443 = vunpack.c.l.b16 %v1420
        %v1444 = vunpack.c.l.b16 %v1421
        %v1445 = vunpack.c.l.b16 %v1422
        %v1446 = vunpack.c.l.b16 %v1423
        %v1447 = vunpack.c.l.b16 %v1424
        %v1448 = vunpack.c.l.b16 %v1425
        %v1449 = vpack.c.b16 %v1440, %v1439
        %v1450 = vpack.c.b16 %v1442, %v1441
        %v1451 = vpack.c.b16 %v1444, %v1443
        %v1452 = vpack.c.b16 %v1446, %v1445
        %v1453 = vpack.c.b16 %v1448, %v1447
        %v1460 = vsel %vm524, %v1427, 0
        %v1463 = vsel %vm524, %v1428, 0
        %1465 = vmatprep.subr.bf16.mxu0 0
        %1466 = vmatpush1.bf16.msra.mxu0 %v1449
        %1467 = vmatprep.subr.bf16.mxu0 0
        %1468 = vmatpush1.bf16.msra.mxu0 %v1450
        %1469 = vmatprep.subr.bf16.mxu0 0
        %1470 = vmatpush1.bf16.msra.mxu0 %v1451
        %1471 = vmatprep.subr.bf16.mxu0 0
        %1472 = vmatpush1.bf16.msra.mxu0 %v1452
        %1473 = vmatprep.subr.bf16.mxu0 0
        %1474 = vmatpush1.bf16.msra.mxu0 %v1453
        %1475 = vmatprep.subr.bf16.mxu0 0
        %1476 = vmatpush1.bf16.msra.mxu0 0
        %1477 = vmatprep.subr.bf16.mxu0 0
        %1478 = vmatpush1.bf16.msra.mxu0 0
        %1479 = vmatprep.subr.bf16.mxu0 0
        %1480 = vmatpush1.bf16.msra.mxu0 0
        %1481 = vmatprep.subr.bf16.mxu0 0
        %1482 = vmatpush1.bf16.msra.mxu0 0
        %1483 = vmatprep.subr.bf16.mxu0 0
        %1484 = vmatpush1.bf16.msra.mxu0 0
        %1485 = vmatprep.subr.bf16.mxu0 0
        %1486 = vmatpush1.bf16.msra.mxu0 0
        %1487 = vmatprep.subr.bf16.mxu0 0
        %1488 = vmatpush1.bf16.msra.mxu0 0
        %1489 = vmatprep.subr.bf16.mxu0 0
        %1490 = vmatpush1.bf16.msra.mxu0 0
        %1491 = vmatprep.subr.bf16.mxu0 0
        %1492 = vmatpush1.bf16.msra.mxu0 0
        %1493 = vmatprep.subr.bf16.mxu0 0
        %1494 = vmatpush1.bf16.msra.mxu0 0
        %1495 = vmatprep.subr.bf16.mxu0 0
        %1496 = vmatpush1.bf16.msra.mxu0 0
        %1497 = vmatprep.mubr.bf16.mxu0 0
        %1498 = vmatmul.mubr.bf16.gmra.mrb[0].mxu0 %v1460
        %v1499 = vpop.f32.mrb[0].mxu0
        %v1500 = vadd.f32 0.0, %v1499
        %v1501 = vpop.f32.mrb[0].mxu0
        %v1502 = vpop.f32.mrb[0].mxu0
        %v1503 = vadd.f32 0.0, %v1502
        %v1504 = vpop.f32.mrb[0].mxu0
        %1505 = vmatprep.mubr.bf16.mxu0 0
        %1506 = vmatmul.mubr.bf16.gmra.mrb[0].mxu0 %v1463
        %v1507 = vpop.f32.mrb[0].mxu0
        %v1508 = vadd.f32 0.0, %v1507
        %v1509 = vpop.f32.mrb[0].mxu0
        %v1510 = vpop.f32.mrb[0].mxu0
        %v1511 = vadd.f32 0.0, %v1510
        %v1512 = vpop.f32.mrb[0].mxu0
        %1513 = vdwg.mxu0
        %v1514 = vadd.f32 %v1339, %v1500
        %v1515 = vadd.f32 %v1340, %v1503
        %v1516 = vadd.f32 %v1341, %v1508
        %v1517 = vadd.f32 %v1342, %v1511
        %v1518 = vunpack.c.l.b16 %v1414
        %v1519 = vpack.c.b16 %v982, %v981
        %v1520 = vpack.c.b16 %v1518, %v983
        %v1522 = vsel %vm524, %v1519, 0
        %v1525 = vsel %vm524, %v1520, 0
        %1527 = vmatprep.subr.bf16.mxu0 0
        %1528 = vmatpush1.bf16.msra.mxu0 %v701
        %1529 = vmatprep.subr.bf16.mxu0 0
        %1530 = vmatpush1.bf16.msra.mxu0 %v702
        %1531 = vmatprep.subr.bf16.mxu0 0
        %1532 = vmatpush1.bf16.msra.mxu0 %v703
        %1533 = vmatprep.subr.bf16.mxu0 0
        %1534 = vmatpush1.bf16.msra.mxu0 %v704
        %1535 = vmatprep.subr.bf16.mxu0 0
        %1536 = vmatpush1.bf16.msra.mxu0 %v705
        %1537 = vmatprep.subr.bf16.mxu0 0
        %1538 = vmatpush1.bf16.msra.mxu0 0
        %1539 = vmatprep.subr.bf16.mxu0 0
        %1540 = vmatpush1.bf16.msra.mxu0 0
        %1541 = vmatprep.subr.bf16.mxu0 0
        %1542 = vmatpush1.bf16.msra.mxu0 0
        %1543 = vmatprep.subr.bf16.mxu0 0
        %1544 = vmatpush1.bf16.msra.mxu0 0
        %1545 = vmatprep.subr.bf16.mxu0 0
        %1546 = vmatpush1.bf16.msra.mxu0 0
        %1547 = vmatprep.subr.bf16.mxu0 0
        %1548 = vmatpush1.bf16.msra.mxu0 0
        %1549 = vmatprep.subr.bf16.mxu0 0
        %1550 = vmatpush1.bf16.msra.mxu0 0
        %1551 = vmatprep.subr.bf16.mxu0 0
        %1552 = vmatpush1.bf16.msra.mxu0 0
        %1553 = vmatprep.subr.bf16.mxu0 0
        %1554 = vmatpush1.bf16.msra.mxu0 0
        %1555 = vmatprep.subr.bf16.mxu0 0
        %1556 = vmatpush1.bf16.msra.mxu0 0
        %1557 = vmatprep.subr.bf16.mxu0 0
        %1558 = vmatpush1.bf16.msra.mxu0 0
        %1559 = vmatprep.mubr.bf16.mxu0 0
        %1560 = vmatmul.mubr.bf16.gmra.mrb[0].mxu0 %v1522
        %v1561 = vpop.f32.mrb[0].mxu0
        %v1562 = vadd.f32 0.0, %v1561
        %v1563 = vpop.f32.mrb[0].mxu0
        %v1564 = vpop.f32.mrb[0].mxu0
        %v1565 = vadd.f32 0.0, %v1564
        %v1566 = vpop.f32.mrb[0].mxu0
        %1567 = vmatprep.mubr.bf16.mxu0 0
        %1568 = vmatmul.mubr.bf16.gmra.mrb[0].mxu0 %v1525
        %v1569 = vpop.f32.mrb[0].mxu0
        %v1570 = vadd.f32 0.0, %v1569
        %v1571 = vpop.f32.mrb[0].mxu0
        %v1572 = vpop.f32.mrb[0].mxu0
        %v1573 = vadd.f32 0.0, %v1572
        %v1574 = vpop.f32.mrb[0].mxu0
        %1575 = vdwg.mxu0
        %v1576 = vadd.f32 %v1401, %v1562
        %v1577 = vadd.f32 %v1402, %v1565
        %v1578 = vadd.f32 %v1403, %v1570
        %v1579 = vadd.f32 %v1404, %v1573
        %s1580 = scalar_lea.vmem %s2, 240
        %v1581 = vld [vmem:[%s1580] sm:$0xf]
        %v1582 = vld [vmem:[%s1580 + $0x4] sm:$0xf]
        %v1583 = vld [vmem:[%s1580 + $0x8] sm:$0xf]
        %v1584 = vld [vmem:[%s1580 + $0xc] sm:$0xf]
        %v1585 = vld [vmem:[%s1580 + $0x10] sm:$0xf]
        %v1586 = vld [vmem:[%s1580 + $0x14] sm:$0xf]
        %v1587 = vld [vmem:[%s1580 + $0x18] sm:$0xf]
        %v1588 = vld [vmem:[%s1580 + $0x1c] sm:$0xf]
        %v1589 = vld [vmem:[%s1580 + $0x20] sm:$0xf]
        %v1590 = vld [vmem:[%s1580 + $0x24] sm:$0xf]
        %v1592 = vunpack.c.l.b16 %v340
        %v1593 = vpack.c.b16 %v1592, %v1057
        %v1604 = vunpack.c.l.b16 %v1581
        %v1605 = vunpack.c.l.b16 %v1582
        %v1606 = vunpack.c.l.b16 %v1583
        %v1607 = vunpack.c.l.b16 %v1584
        %v1608 = vunpack.c.l.b16 %v1585
        %v1609 = vunpack.c.l.b16 %v1586
        %v1610 = vunpack.c.l.b16 %v1587
        %v1611 = vunpack.c.l.b16 %v1588
        %v1612 = vunpack.c.l.b16 %v1589
        %v1613 = vunpack.c.l.b16 %v1590
        %v1614 = vpack.c.b16 %v1605, %v1604
        %v1615 = vpack.c.b16 %v1607, %v1606
        %v1616 = vpack.c.b16 %v1609, %v1608
        %v1617 = vpack.c.b16 %v1611, %v1610
        %v1618 = vpack.c.b16 %v1613, %v1612
        %v1625 = vsel %vm524, %v1593, 0
        %1627 = vmatprep.subr.bf16.mxu0 0
        %1628 = vmatpush1.bf16.msra.mxu0 %v1614
        %1629 = vmatprep.subr.bf16.mxu0 0
        %1630 = vmatpush1.bf16.msra.mxu0 %v1615
        %1631 = vmatprep.subr.bf16.mxu0 0
        %1632 = vmatpush1.bf16.msra.mxu0 %v1616
        %1633 = vmatprep.subr.bf16.mxu0 0
        %1634 = vmatpush1.bf16.msra.mxu0 %v1617
        %1635 = vmatprep.subr.bf16.mxu0 0
        %1636 = vmatpush1.bf16.msra.mxu0 %v1618
        %1637 = vmatprep.subr.bf16.mxu0 0
        %1638 = vmatpush1.bf16.msra.mxu0 0
        %1639 = vmatprep.subr.bf16.mxu0 0
        %1640 = vmatpush1.bf16.msra.mxu0 0
        %1641 = vmatprep.subr.bf16.mxu0 0
        %1642 = vmatpush1.bf16.msra.mxu0 0
        %1643 = vmatprep.subr.bf16.mxu0 0
        %1644 = vmatpush1.bf16.msra.mxu0 0
        %1645 = vmatprep.subr.bf16.mxu0 0
        %1646 = vmatpush1.bf16.msra.mxu0 0
        %1647 = vmatprep.subr.bf16.mxu0 0
        %1648 = vmatpush1.bf16.msra.mxu0 0
        %1649 = vmatprep.subr.bf16.mxu0 0
        %1650 = vmatpush1.bf16.msra.mxu0 0
        %1651 = vmatprep.subr.bf16.mxu0 0
        %1652 = vmatpush1.bf16.msra.mxu0 0
        %1653 = vmatprep.subr.bf16.mxu0 0
        %1654 = vmatpush1.bf16.msra.mxu0 0
        %1655 = vmatprep.subr.bf16.mxu0 0
        %1656 = vmatpush1.bf16.msra.mxu0 0
        %1657 = vmatprep.subr.bf16.mxu0 0
        %1658 = vmatpush1.bf16.msra.mxu0 0
        %1659 = vmatprep.mubr.bf16.mxu0 0
        %1660 = vmatmul.mubr.bf16.gmra.mrb[0].mxu0 %v624
        %v1661 = vpop.f32.mrb[0].mxu0
        %v1662 = vadd.f32 0.0, %v1661
        %v1663 = vpop.f32.mrb[0].mxu0
        %v1664 = vpop.f32.mrb[0].mxu0
        %v1665 = vadd.f32 0.0, %v1664
        %v1666 = vpop.f32.mrb[0].mxu0
        %1667 = vmatprep.mubr.bf16.mxu0 0
        %1668 = vmatmul.mubr.bf16.gmra.mrb[0].mxu0 %v1625
        %v1669 = vpop.f32.mrb[0].mxu0
        %v1670 = vadd.f32 0.0, %v1669
        %v1671 = vpop.f32.mrb[0].mxu0
        %v1672 = vpop.f32.mrb[0].mxu0
        %v1673 = vadd.f32 0.0, %v1672
        %v1674 = vpop.f32.mrb[0].mxu0
        %1675 = vdwg.mxu0
        %v1676 = vadd.f32 %v1514, %v1662
        %v1677 = vadd.f32 %v1515, %v1665
        %v1678 = vadd.f32 %v1516, %v1670
        %v1679 = vadd.f32 %v1517, %v1673
        %v1681 = vunpack.c.l.b16 %v328
        %v1682 = vpack.c.b16 %v1681, %v1150
        %v1684 = vsel %vm524, %v1682, 0
        %1686 = vmatprep.subr.bf16.mxu0 0
        %1687 = vmatpush1.bf16.msra.mxu0 %v701
        %1688 = vmatprep.subr.bf16.mxu0 0
        %1689 = vmatpush1.bf16.msra.mxu0 %v702
        %1690 = vmatprep.subr.bf16.mxu0 0
        %1691 = vmatpush1.bf16.msra.mxu0 %v703
        %1692 = vmatprep.subr.bf16.mxu0 0
        %1693 = vmatpush1.bf16.msra.mxu0 %v704
        %1694 = vmatprep.subr.bf16.mxu0 0
        %1695 = vmatpush1.bf16.msra.mxu0 %v705
        %1696 = vmatprep.subr.bf16.mxu0 0
        %1697 = vmatpush1.bf16.msra.mxu0 0
        %1698 = vmatprep.subr.bf16.mxu0 0
        %1699 = vmatpush1.bf16.msra.mxu0 0
        %1700 = vmatprep.subr.bf16.mxu0 0
        %1701 = vmatpush1.bf16.msra.mxu0 0
        %1702 = vmatprep.subr.bf16.mxu0 0
        %1703 = vmatpush1.bf16.msra.mxu0 0
        %1704 = vmatprep.subr.bf16.mxu0 0
        %1705 = vmatpush1.bf16.msra.mxu0 0
        %1706 = vmatprep.subr.bf16.mxu0 0
        %1707 = vmatpush1.bf16.msra.mxu0 0
        %1708 = vmatprep.subr.bf16.mxu0 0
        %1709 = vmatpush1.bf16.msra.mxu0 0
        %1710 = vmatprep.subr.bf16.mxu0 0
        %1711 = vmatpush1.bf16.msra.mxu0 0
        %1712 = vmatprep.subr.bf16.mxu0 0
        %1713 = vmatpush1.bf16.msra.mxu0 0
        %1714 = vmatprep.subr.bf16.mxu0 0
        %1715 = vmatpush1.bf16.msra.mxu0 0
        %1716 = vmatprep.subr.bf16.mxu0 0
        %1717 = vmatpush1.bf16.msra.mxu0 0
        %1718 = vmatprep.mubr.bf16.mxu0 0
        %1719 = vmatmul.mubr.bf16.gmra.mrb[0].mxu0 %v780
        %v1720 = vpop.f32.mrb[0].mxu0
        %v1721 = vadd.f32 0.0, %v1720
        %v1722 = vpop.f32.mrb[0].mxu0
        %v1723 = vpop.f32.mrb[0].mxu0
        %v1724 = vadd.f32 0.0, %v1723
        %v1725 = vpop.f32.mrb[0].mxu0
        %1726 = vmatprep.mubr.bf16.mxu0 0
        %1727 = vmatmul.mubr.bf16.gmra.mrb[0].mxu0 %v1684
        %v1728 = vpop.f32.mrb[0].mxu0
        %v1729 = vadd.f32 0.0, %v1728
        %v1730 = vpop.f32.mrb[0].mxu0
        %v1731 = vpop.f32.mrb[0].mxu0
        %v1732 = vadd.f32 0.0, %v1731
        %v1733 = vpop.f32.mrb[0].mxu0
        %1734 = vdwg.mxu0
        %v1735 = vadd.f32 %v1576, %v1721
        %v1736 = vadd.f32 %v1577, %v1724
        %v1737 = vadd.f32 %v1578, %v1729
        %v1738 = vadd.f32 %v1579, %v1732
        %v1740 = vshrl.u32 %v340, 16
        %v1742 = vrot.slane %v1740, 4
        %v1743 = vshll.u32 %v340, 16
        %v1745 = vrot.slane %v1743, 5
        %v1746 = vor.u32 %v1742, %v1745
        %v1747 = vrot.slane %v1746, 4
        %v1749 = vshll.u32 %v341, 16
        %v1751 = vrot.slane %v1749, 5
        %v1752 = vsel %vm364, %v1747, %v1751
        %v1754 = vshrl.u32 %v328, 16
        %v1756 = vrot.slane %v1754, 4
        %v1757 = vshll.u32 %v328, 16
        %v1759 = vrot.slane %v1757, 5
        %v1760 = vor.u32 %v1756, %v1759
        %v1761 = vrot.slane %v1760, 4
        %v1763 = vshll.u32 %v329, 16
        %v1765 = vrot.slane %v1763, 5
        %v1766 = vsel %vm364, %v1761, %v1765
        %s1767 = scalar_lea.vmem %s2, 280
        %v1768 = vld [vmem:[%s1767] sm:$0xf]
        %v1769 = vld [vmem:[%s1767 + $0x4] sm:$0xf]
        %v1770 = vld [vmem:[%s1767 + $0x8] sm:$0xf]
        %v1771 = vld [vmem:[%s1767 + $0xc] sm:$0xf]
        %v1772 = vld [vmem:[%s1767 + $0x10] sm:$0xf]
        %v1773 = vld [vmem:[%s1767 + $0x14] sm:$0xf]
        %v1774 = vld [vmem:[%s1767 + $0x18] sm:$0xf]
        %v1775 = vld [vmem:[%s1767 + $0x1c] sm:$0xf]
        %v1776 = vld [vmem:[%s1767 + $0x20] sm:$0xf]
        %v1777 = vld [vmem:[%s1767 + $0x24] sm:$0xf]
        %v1778 = vunpack.c.l.b16 %v1752
        %v1779 = vpack.c.b16 %v1778, %v1251
        %v1790 = vunpack.c.l.b16 %v1768
        %v1791 = vunpack.c.l.b16 %v1769
        %v1792 = vunpack.c.l.b16 %v1770
        %v1793 = vunpack.c.l.b16 %v1771
        %v1794 = vunpack.c.l.b16 %v1772
        %v1795 = vunpack.c.l.b16 %v1773
        %v1796 = vunpack.c.l.b16 %v1774
        %v1797 = vunpack.c.l.b16 %v1775
        %v1798 = vunpack.c.l.b16 %v1776
        %v1799 = vunpack.c.l.b16 %v1777
        %v1800 = vpack.c.b16 %v1791, %v1790
        %v1801 = vpack.c.b16 %v1793, %v1792
        %v1802 = vpack.c.b16 %v1795, %v1794
        %v1803 = vpack.c.b16 %v1797, %v1796
        %v1804 = vpack.c.b16 %v1799, %v1798
        %v1811 = vsel %vm524, %v1779, 0
        %1813 = vmatprep.subr.bf16.mxu0 0
        %1814 = vmatpush1.bf16.msra.mxu0 %v1800
        %1815 = vmatprep.subr.bf16.mxu0 0
        %1816 = vmatpush1.bf16.msra.mxu0 %v1801
        %1817 = vmatprep.subr.bf16.mxu0 0
        %1818 = vmatpush1.bf16.msra.mxu0 %v1802
        %1819 = vmatprep.subr.bf16.mxu0 0
        %1820 = vmatpush1.bf16.msra.mxu0 %v1803
        %1821 = vmatprep.subr.bf16.mxu0 0
        %1822 = vmatpush1.bf16.msra.mxu0 %v1804
        %1823 = vmatprep.subr.bf16.mxu0 0
        %1824 = vmatpush1.bf16.msra.mxu0 0
        %1825 = vmatprep.subr.bf16.mxu0 0
        %1826 = vmatpush1.bf16.msra.mxu0 0
        %1827 = vmatprep.subr.bf16.mxu0 0
        %1828 = vmatpush1.bf16.msra.mxu0 0
        %1829 = vmatprep.subr.bf16.mxu0 0
        %1830 = vmatpush1.bf16.msra.mxu0 0
        %1831 = vmatprep.subr.bf16.mxu0 0
        %1832 = vmatpush1.bf16.msra.mxu0 0
        %1833 = vmatprep.subr.bf16.mxu0 0
        %1834 = vmatpush1.bf16.msra.mxu0 0
        %1835 = vmatprep.subr.bf16.mxu0 0
        %1836 = vmatpush1.bf16.msra.mxu0 0
        %1837 = vmatprep.subr.bf16.mxu0 0
        %1838 = vmatpush1.bf16.msra.mxu0 0
        %1839 = vmatprep.subr.bf16.mxu0 0
        %1840 = vmatpush1.bf16.msra.mxu0 0
        %1841 = vmatprep.subr.bf16.mxu0 0
        %1842 = vmatpush1.bf16.msra.mxu0 0
        %1843 = vmatprep.subr.bf16.mxu0 0
        %1844 = vmatpush1.bf16.msra.mxu0 0
        %1845 = vmatprep.mubr.bf16.mxu0 0
        %1846 = vmatmul.mubr.bf16.gmra.mrb[0].mxu0 %v529
        %v1847 = vpop.f32.mrb[0].mxu0
        %v1848 = vadd.f32 0.0, %v1847
        %v1849 = vpop.f32.mrb[0].mxu0
        %v1850 = vpop.f32.mrb[0].mxu0
        %v1851 = vadd.f32 0.0, %v1850
        %v1852 = vpop.f32.mrb[0].mxu0
        %1853 = vmatprep.mubr.bf16.mxu0 0
        %1854 = vmatmul.mubr.bf16.gmra.mrb[0].mxu0 %v1811
        %v1855 = vpop.f32.mrb[0].mxu0
        %v1856 = vadd.f32 0.0, %v1855
        %v1857 = vpop.f32.mrb[0].mxu0
        %v1858 = vpop.f32.mrb[0].mxu0
        %v1859 = vadd.f32 0.0, %v1858
        %v1860 = vpop.f32.mrb[0].mxu0
        %1861 = vdwg.mxu0
        %v1862 = vadd.f32 %v1676, %v1848
        %v1863 = vadd.f32 %v1677, %v1851
        %v1864 = vadd.f32 %v1678, %v1856
        %v1865 = vadd.f32 %v1679, %v1859
        %v1866 = vunpack.c.l.b16 %v1766
        %v1867 = vpack.c.b16 %v1866, %v1343
        %v1869 = vsel %vm524, %v1867, 0
        %1871 = vmatprep.subr.bf16.mxu0 0
        %1872 = vmatpush1.bf16.msra.mxu0 %v701
        %1873 = vmatprep.subr.bf16.mxu0 0
        %1874 = vmatpush1.bf16.msra.mxu0 %v702
        %1875 = vmatprep.subr.bf16.mxu0 0
        %1876 = vmatpush1.bf16.msra.mxu0 %v703
        %1877 = vmatprep.subr.bf16.mxu0 0
        %1878 = vmatpush1.bf16.msra.mxu0 %v704
        %1879 = vmatprep.subr.bf16.mxu0 0
        %1880 = vmatpush1.bf16.msra.mxu0 %v705
        %1881 = vmatprep.subr.bf16.mxu0 0
        %1882 = vmatpush1.bf16.msra.mxu0 0
        %1883 = vmatprep.subr.bf16.mxu0 0
        %1884 = vmatpush1.bf16.msra.mxu0 0
        %1885 = vmatprep.subr.bf16.mxu0 0
        %1886 = vmatpush1.bf16.msra.mxu0 0
        %1887 = vmatprep.subr.bf16.mxu0 0
        %1888 = vmatpush1.bf16.msra.mxu0 0
        %1889 = vmatprep.subr.bf16.mxu0 0
        %1890 = vmatpush1.bf16.msra.mxu0 0
        %1891 = vmatprep.subr.bf16.mxu0 0
        %1892 = vmatpush1.bf16.msra.mxu0 0
        %1893 = vmatprep.subr.bf16.mxu0 0
        %1894 = vmatpush1.bf16.msra.mxu0 0
        %1895 = vmatprep.subr.bf16.mxu0 0
        %1896 = vmatpush1.bf16.msra.mxu0 0
        %1897 = vmatprep.subr.bf16.mxu0 0
        %1898 = vmatpush1.bf16.msra.mxu0 0
        %1899 = vmatprep.subr.bf16.mxu0 0
        %1900 = vmatpush1.bf16.msra.mxu0 0
        %1901 = vmatprep.subr.bf16.mxu0 0
        %1902 = vmatpush1.bf16.msra.mxu0 0
        %1903 = vmatprep.mubr.bf16.mxu0 0
        %1904 = vmatmul.mubr.bf16.gmra.mrb[0].mxu0 %v715
        %v1905 = vpop.f32.mrb[0].mxu0
        %v1906 = vadd.f32 0.0, %v1905
        %v1907 = vpop.f32.mrb[0].mxu0
        %v1908 = vpop.f32.mrb[0].mxu0
        %v1909 = vadd.f32 0.0, %v1908
        %v1910 = vpop.f32.mrb[0].mxu0
        %1911 = vmatprep.mubr.bf16.mxu0 0
        %1912 = vmatmul.mubr.bf16.gmra.mrb[0].mxu0 %v1869
        %v1913 = vpop.f32.mrb[0].mxu0
        %v1914 = vadd.f32 0.0, %v1913
        %v1915 = vpop.f32.mrb[0].mxu0
        %v1916 = vpop.f32.mrb[0].mxu0
        %v1917 = vadd.f32 0.0, %v1916
        %v1918 = vpop.f32.mrb[0].mxu0
        %1919 = vdwg.mxu0
        %v1920 = vadd.f32 %v1735, %v1906
        %v1921 = vadd.f32 %v1736, %v1909
        %v1922 = vadd.f32 %v1737, %v1914
        %v1923 = vadd.f32 %v1738, %v1917
        %v1925 = vrot.slane %v340, 5
        %v1926 = vrot.slane %v1925, 4
        %v1927 = vrot.slane %v341, 5
        %v1928 = vsel %vm837, %v1926, %v1927
        %v1930 = vrot.slane %v328, 5
        %v1931 = vrot.slane %v1930, 4
        %v1932 = vrot.slane %v329, 5
        %v1933 = vsel %vm837, %v1931, %v1932
        %s1934 = scalar_lea.vmem %s2, 320
        %v1935 = vld [vmem:[%s1934] sm:$0xf]
        %v1936 = vld [vmem:[%s1934 + $0x4] sm:$0xf]
        %v1937 = vld [vmem:[%s1934 + $0x8] sm:$0xf]
        %v1938 = vld [vmem:[%s1934 + $0xc] sm:$0xf]
        %v1939 = vld [vmem:[%s1934 + $0x10] sm:$0xf]
        %v1940 = vld [vmem:[%s1934 + $0x14] sm:$0xf]
        %v1941 = vld [vmem:[%s1934 + $0x18] sm:$0xf]
        %v1942 = vld [vmem:[%s1934 + $0x1c] sm:$0xf]
        %v1943 = vld [vmem:[%s1934 + $0x20] sm:$0xf]
        %v1944 = vld [vmem:[%s1934 + $0x24] sm:$0xf]
        %v1945 = vunpack.c.l.b16 %v1928
        %v1946 = vpack.c.b16 %v1945, %v1426
        %v1957 = vunpack.c.l.b16 %v1935
        %v1958 = vunpack.c.l.b16 %v1936
        %v1959 = vunpack.c.l.b16 %v1937
        %v1960 = vunpack.c.l.b16 %v1938
        %v1961 = vunpack.c.l.b16 %v1939
        %v1962 = vunpack.c.l.b16 %v1940
        %v1963 = vunpack.c.l.b16 %v1941
        %v1964 = vunpack.c.l.b16 %v1942
        %v1965 = vunpack.c.l.b16 %v1943
        %v1966 = vunpack.c.l.b16 %v1944
        %v1967 = vpack.c.b16 %v1958, %v1957
        %v1968 = vpack.c.b16 %v1960, %v1959
        %v1969 = vpack.c.b16 %v1962, %v1961
        %v1970 = vpack.c.b16 %v1964, %v1963
        %v1971 = vpack.c.b16 %v1966, %v1965
        %v1978 = vsel %vm524, %v1946, 0
        %1980 = vmatprep.subr.bf16.mxu0 0
        %1981 = vmatpush1.bf16.msra.mxu0 %v1967
        %1982 = vmatprep.subr.bf16.mxu0 0
        %1983 = vmatpush1.bf16.msra.mxu0 %v1968
        %1984 = vmatprep.subr.bf16.mxu0 0
        %1985 = vmatpush1.bf16.msra.mxu0 %v1969
        %1986 = vmatprep.subr.bf16.mxu0 0
        %1987 = vmatpush1.bf16.msra.mxu0 %v1970
        %1988 = vmatprep.subr.bf16.mxu0 0
        %1989 = vmatpush1.bf16.msra.mxu0 %v1971
        %1990 = vmatprep.subr.bf16.mxu0 0
        %1991 = vmatpush1.bf16.msra.mxu0 0
        %1992 = vmatprep.subr.bf16.mxu0 0
        %1993 = vmatpush1.bf16.msra.mxu0 0
        %1994 = vmatprep.subr.bf16.mxu0 0
        %1995 = vmatpush1.bf16.msra.mxu0 0
        %1996 = vmatprep.subr.bf16.mxu0 0
        %1997 = vmatpush1.bf16.msra.mxu0 0
        %1998 = vmatprep.subr.bf16.mxu0 0
        %1999 = vmatpush1.bf16.msra.mxu0 0
        %2000 = vmatprep.subr.bf16.mxu0 0
        %2001 = vmatpush1.bf16.msra.mxu0 0
        %2002 = vmatprep.subr.bf16.mxu0 0
        %2003 = vmatpush1.bf16.msra.mxu0 0
        %2004 = vmatprep.subr.bf16.mxu0 0
        %2005 = vmatpush1.bf16.msra.mxu0 0
        %2006 = vmatprep.subr.bf16.mxu0 0
        %2007 = vmatpush1.bf16.msra.mxu0 0
        %2008 = vmatprep.subr.bf16.mxu0 0
        %2009 = vmatpush1.bf16.msra.mxu0 0
        %2010 = vmatprep.subr.bf16.mxu0 0
        %2011 = vmatpush1.bf16.msra.mxu0 0
        %2012 = vmatprep.mubr.bf16.mxu0 0
        %2013 = vmatmul.mubr.bf16.gmra.mrb[0].mxu0 %v925
        %v2014 = vpop.f32.mrb[0].mxu0
        %v2015 = vadd.f32 0.0, %v2014
        %v2016 = vpop.f32.mrb[0].mxu0
        %v2017 = vpop.f32.mrb[0].mxu0
        %v2018 = vadd.f32 0.0, %v2017
        %v2019 = vpop.f32.mrb[0].mxu0
        %2020 = vmatprep.mubr.bf16.mxu0 0
        %2021 = vmatmul.mubr.bf16.gmra.mrb[0].mxu0 %v1978
        %v2022 = vpop.f32.mrb[0].mxu0
        %v2023 = vadd.f32 0.0, %v2022
        %v2024 = vpop.f32.mrb[0].mxu0
        %v2025 = vpop.f32.mrb[0].mxu0
        %v2026 = vadd.f32 0.0, %v2025
        %v2027 = vpop.f32.mrb[0].mxu0
        %2028 = vdwg.mxu0
        %v2029 = vadd.f32 %v1862, %v2015
        %v2030 = vadd.f32 %v1863, %v2018
        %v2031 = vadd.f32 %v1864, %v2023
        %v2032 = vadd.f32 %v1865, %v2026
        %v2033 = vunpack.c.l.b16 %v1933
        %v2034 = vpack.c.b16 %v2033, %v1518
        %v2036 = vsel %vm524, %v2034, 0
        %2038 = vmatprep.subr.bf16.mxu0 0
        %2039 = vmatpush1.bf16.msra.mxu0 %v701
        %2040 = vmatprep.subr.bf16.mxu0 0
        %2041 = vmatpush1.bf16.msra.mxu0 %v702
        %2042 = vmatprep.subr.bf16.mxu0 0
        %2043 = vmatpush1.bf16.msra.mxu0 %v703
        %2044 = vmatprep.subr.bf16.mxu0 0
        %2045 = vmatpush1.bf16.msra.mxu0 %v704
        %2046 = vmatprep.subr.bf16.mxu0 0
        %2047 = vmatpush1.bf16.msra.mxu0 %v705
        %2048 = vmatprep.subr.bf16.mxu0 0
        %2049 = vmatpush1.bf16.msra.mxu0 0
        %2050 = vmatprep.subr.bf16.mxu0 0
        %2051 = vmatpush1.bf16.msra.mxu0 0
        %2052 = vmatprep.subr.bf16.mxu0 0
        %2053 = vmatpush1.bf16.msra.mxu0 0
        %2054 = vmatprep.subr.bf16.mxu0 0
        %2055 = vmatpush1.bf16.msra.mxu0 0
        %2056 = vmatprep.subr.bf16.mxu0 0
        %2057 = vmatpush1.bf16.msra.mxu0 0
        %2058 = vmatprep.subr.bf16.mxu0 0
        %2059 = vmatpush1.bf16.msra.mxu0 0
        %2060 = vmatprep.subr.bf16.mxu0 0
        %2061 = vmatpush1.bf16.msra.mxu0 0
        %2062 = vmatprep.subr.bf16.mxu0 0
        %2063 = vmatpush1.bf16.msra.mxu0 0
        %2064 = vmatprep.subr.bf16.mxu0 0
        %2065 = vmatpush1.bf16.msra.mxu0 0
        %2066 = vmatprep.subr.bf16.mxu0 0
        %2067 = vmatpush1.bf16.msra.mxu0 0
        %2068 = vmatprep.subr.bf16.mxu0 0
        %2069 = vmatpush1.bf16.msra.mxu0 0
        %2070 = vmatprep.mubr.bf16.mxu0 0
        %2071 = vmatmul.mubr.bf16.gmra.mrb[0].mxu0 %v990
        %v2072 = vpop.f32.mrb[0].mxu0
        %v2073 = vadd.f32 0.0, %v2072
        %v2074 = vpop.f32.mrb[0].mxu0
        %v2075 = vpop.f32.mrb[0].mxu0
        %v2076 = vadd.f32 0.0, %v2075
        %v2077 = vpop.f32.mrb[0].mxu0
        %2078 = vmatprep.mubr.bf16.mxu0 0
        %2079 = vmatmul.mubr.bf16.gmra.mrb[0].mxu0 %v2036
        %v2080 = vpop.f32.mrb[0].mxu0
        %v2081 = vadd.f32 0.0, %v2080
        %v2082 = vpop.f32.mrb[0].mxu0
        %v2083 = vpop.f32.mrb[0].mxu0
        %v2084 = vadd.f32 0.0, %v2083
        %v2085 = vpop.f32.mrb[0].mxu0
        %2086 = vdwg.mxu0
        %v2087 = vadd.f32 %v1920, %v2073
        %v2088 = vadd.f32 %v1921, %v2076
        %v2089 = vadd.f32 %v1922, %v2081
        %v2090 = vadd.f32 %v1923, %v2084
        %v2091 = vmax.f32 %v2087, 0.0
        %v2092 = vmax.f32 %v2088, 0.0
        %v2093 = vmax.f32 %v2089, 0.0
        %v2094 = vmax.f32 %v2090, 0.0
        %v2095 = vmin.f32 %v2091, 1.0
        %v2096 = vmin.f32 %v2092, 1.0
        %v2097 = vmin.f32 %v2093, 1.0
        %v2098 = vmin.f32 %v2094, 1.0
        %v2099 = vadd.f32 %v2087, 1e-08
        %v2100 = vadd.f32 %v2088, 1e-08
        %v2101 = vadd.f32 %v2089, 1e-08
        %v2102 = vadd.f32 %v2090, 1e-08
        %v2103 = vrcp.pop %v2099
        %v2104 = vrcp.pop %v2100
        %v2105 = vrcp.pop %v2101
        %v2106 = vrcp.pop %v2102
        %v2107 = vmul.f32 %v2103, 216.0
        %v2108 = vmul.f32 %v2104, 216.0
        %v2109 = vmul.f32 %v2105, 216.0
        %v2110 = vmul.f32 %v2106, 216.0
        %v2111 = vmul.f32 %v2107, %v2095
        %v2112 = vmul.f32 %v2108, %v2096
        %v2113 = vmul.f32 %v2109, %v2097
        %v2114 = vmul.f32 %v2110, %v2098
        %v2115 = vmul.f32 %v2029, %v2111
        %v2116 = vmul.f32 %v2030, %v2112
        %v2117 = vmul.f32 %v2031, %v2113
        %v2118 = vmul.f32 %v2032, %v2114
        %v2119 = vld [vmem:[%s4] sm:$0x1]
        %v2121 = vlaneseq
        %v2122 = vshrl.u32 %v2121, 7
        %v2123 = vsub.s32 0, %v2122
        %v2124 = vrot.slane %v2119, %v2123
        %v2126 = vadd.f32 %v2115, %v2124
        %v2127 = vadd.f32 %v2116, %v2124
        %v2128 = vadd.f32 %v2117, %v2124
        %v2129 = vadd.f32 %v2118, %v2124
        %v2130 = vmul.f32 %v2126, %v2095
        %v2131 = vmul.f32 %v2127, %v2096
        %v2132 = vmul.f32 %v2128, %v2097
        %v2133 = vmul.f32 %v2129, %v2098
        %vm2134 = vcmp.ge.f32.partialorder %v2130, 0.0
        %vm2135 = vcmp.ge.f32.partialorder %v2131, 0.0
        %vm2136 = vcmp.ge.f32.partialorder %v2132, 0.0
        %vm2137 = vcmp.ge.f32.partialorder %v2133, 0.0
        %v2138 = vmul.f32 %v2130, 0.01
        %v2139 = vmul.f32 %v2131, 0.01
        %v2140 = vmul.f32 %v2132, 0.01
        %v2141 = vmul.f32 %v2133, 0.01
        %v2142 = vsel %vm2134, %v2130, %v2138
        %v2143 = vsel %vm2135, %v2131, %v2139
        %v2144 = vsel %vm2136, %v2132, %v2140
        %v2145 = vsel %vm2137, %v2133, %v2141
        %2146 = vst [vmem:[%s279] sm:$0xff] %v2142
        %2147 = vst [vmem:[%s279 + $0x8] sm:$0xff] %v2143
        %2148 = vst [vmem:[%s279 + $0x10] sm:$0xff] %v2144
        %2149 = vst [vmem:[%s279 + $0x18] sm:$0xff] %v2145
        %2150 = vst [vmem:[%s286] sm:$0xff] %v2095
        %2151 = vst [vmem:[%s286 + $0x8] sm:$0xff] %v2096
        %2152 = vst [vmem:[%s286 + $0x10] sm:$0xff] %v2097
        %2153 = vst [vmem:[%s286 + $0x18] sm:$0xff] %v2098
        %s2154 = sand.u32 %s161, 1
        %s2155 = scalar_lea.sflag [#allocation3], %s2154
        %s2156 = sand.u32 %s161, 1
        %s2157 = smul.addr %s2156, 32
        %s2158 = scalar_lea.vmem [#allocation2], %s2157
        %s2159 = sand.u32 %s189, 1
        %s2160 = scalar_lea.sflag [#allocation5], %s2159
        %s2161 = sand.u32 %s189, 1
        %s2162 = smul.addr %s2161, 32
        %s2163 = scalar_lea.vmem [#allocation4], %s2162
        // Predicated region
        $region41: #{tpu_custom_call.1} parent=39 // pred_check
          %p2164 = pneg %p171
        $region42: #{tpu_custom_call.1} parent=39 // pred_check_branch
          %2166 = sbr.rel (%p2164) target = $region44
        $region43: #{tpu_custom_call.1} parent=39 // pred_region
          %s2167 = smul.u32 4, %s29
          %s2169 = ssub.s32 512, 512
          %2170 = vsyncadd %s2155, %s2169
          %s2171 = smul.addr %s28, 8
          %s2172 = sadd.s32 %s2167, %s2171
          %s2173 = smul.addr %s2172, 128
          %s2174 = scalar_lea.hbm %s5, %s2173
          %s2175 = sshll.u32 %s2158, 4
          %s2176 = int_to_ptr.vmem [resolvable:$true] %s2175
          %2181 = dma.vmem_to_hbm [thread:$0]  %s2176, 512, %s2174, %s2155, 128, 128, 8
        $region44: #{tpu_custom_call.1} parent=39 // pred_fallthru
          _
        // Predicated region
        $region45: #{tpu_custom_call.1} parent=39 // pred_check
          %p2182 = pneg %p199
        $region46: #{tpu_custom_call.1} parent=39 // pred_check_branch
          %2184 = sbr.rel (%p2182) target = $region48
        $region47: #{tpu_custom_call.1} parent=39 // pred_region
          %s2185 = smul.u32 4, %s29
          %s2187 = ssub.s32 512, 512
          %2188 = vsyncadd %s2160, %s2187
          %s2189 = smul.addr %s28, 8
          %s2190 = sadd.s32 %s2185, %s2189
          %s2191 = smul.addr %s2190, 128
          %s2192 = scalar_lea.hbm %s6, %s2191
          %s2193 = sshll.u32 %s2163, 4
          %s2194 = int_to_ptr.vmem [resolvable:$true] %s2193
          %2199 = dma.vmem_to_hbm [thread:$0]  %s2194, 512, %s2192, %s2160, 128, 128, 8
        $region48: #{tpu_custom_call.1} parent=39 // pred_fallthru
          _
      $region40: #{tpu_custom_call.1} parent=5 // pred_fallthru
        _
      %p2200 = scmp.le.s32.totalorder 2, %s19
      // Predicated region
      $region49: #{tpu_custom_call.1} parent=5 // pred_check
        %p2201 = pneg %p2200
      $region50: #{tpu_custom_call.1} parent=5 // pred_check_branch
        %2203 = sbr.rel (%p2201) target = $region52
      $region51: #{tpu_custom_call.1} parent=5 // pred_region
        %s2204 = ssub.s32 %s19, 2
        // Predicated region
        $region53: #{tpu_custom_call.1} parent=51 // pred_check
          %p2205 = pneg %p177
        $region54: #{tpu_custom_call.1} parent=51 // pred_check_branch
          %2207 = sbr.rel (%p2205) target = $region56
        $region55: #{tpu_custom_call.1} parent=51 // pred_region
          %s2208 = sand.u32 %s162, 1
          %s2209 = scalar_lea.sflag [#allocation3], %s2208
          %s2210 = sand.u32 %s162, 1
          %s2211 = smul.addr %s2210, 32
          %s2212 = scalar_lea.vmem [#allocation2], %s2211
          %2213 = dma.done %s2209, 512
        $region56: #{tpu_custom_call.1} parent=51 // pred_fallthru
          _
        // Predicated region
        $region57: #{tpu_custom_call.1} parent=51 // pred_check
          %p2214 = pneg %p205
        $region58: #{tpu_custom_call.1} parent=51 // pred_check_branch
          %2216 = sbr.rel (%p2214) target = $region60
        $region59: #{tpu_custom_call.1} parent=51 // pred_region
          %s2217 = sand.u32 %s190, 1
          %s2218 = scalar_lea.sflag [#allocation5], %s2217
          %s2219 = sand.u32 %s190, 1
          %s2220 = smul.addr %s2219, 32
          %s2221 = scalar_lea.vmem [#allocation4], %s2220
          %2222 = dma.done %s2218, 512
        $region60: #{tpu_custom_call.1} parent=51 // pred_fallthru
          _
      $region52: #{tpu_custom_call.1} parent=5 // pred_fallthru
        _
    $region6: #{tpu_custom_call.1} parent=1 // loop_footer
      %s23 = sadd.s32 1, %s19
    $region7: #{tpu_custom_call.1} parent=1 // loop_footer_branch
      %18 = sbr.rel target = $region3
    $region8: #{tpu_custom_call.1} parent=1 // loop_exit
      _
    %2223 = vsyncpa [#allocation3], 1
    %s2224 = scalar_lea.sflag [#allocation3], 1
    %2225 = vsyncpa %s2224, 1
    %2226 = vsyncpa [#allocation5], 1
    %s2227 = scalar_lea.sflag [#allocation5], 1
    %2228 = vsyncpa %s2227, 1

</llo_original>
